<compile_context>
chip_gen: v7x
topology: tpu7x:2x2x1
jax: 0.10.0
libtpu: 0.0.40
codegen_flags: <defaults>
</compile_context>

<pallas_src>
import math
import functools

import jax
import jax.numpy as jnp
from jax import lax
from jax.experimental import pallas as pl
from jax.experimental.pallas import tpu as pltpu

F32 = jnp.float32
BF16 = jnp.bfloat16


def _zero_idx(nd, i):
    return (0,) * nd


# ---------------------------------------------------------------------------
# in-kernel building blocks
# ---------------------------------------------------------------------------
def _conv_im2col(read_tap, w_ref, im2_ref, *, kk, cin, WS, WOUT, dil):
    """Dense kk x kk conv as ONE MXU matmul (bf16 operands, f32 accumulation):
    stack the kk*kk (optionally dilated) tap slices into the im2col scratch and
    multiply by the pre-reshaped (Cout, kk*kk*cin) bf16 weight."""
    pad = kk // 2
    for kh in range(kk):
        for kw in range(kk):
            t = kh * kk + kw
            d = ((kh - pad) * WS + (kw - pad)) * dil
            im2_ref[t * cin:(t + 1) * cin, :] = read_tap(d)
    return jnp.dot(w_ref[...], im2_ref[...].astype(BF16),
                   preferred_element_type=F32)


def _main_path(x_ref, w1_ref, sb1_ref, w2_ref, sb2_ref, img, im2_ref, aslab_ref,
               *, C1, Cinit, Cnew, C2, k, dw, ratio, WS, M, WOUT):
    """primary_conv (+BN+ReLU) and cheap_operation (+BN+ReLU).  Returns
    (y1, y2) over the compute window with ring/margin positions forced to 0."""
    # primary conv: k x k dense conv, single im2col matmul
    y1 = _conv_im2col(lambda d: x_ref[:, M + d:M + d + WOUT],
                      w1_ref, im2_ref, kk=k, cin=C1, WS=WS, WOUT=WOUT, dil=1)
    y1 = jnp.maximum(y1 * sb1_ref[0:Cinit, :] + sb1_ref[Cinit:2 * Cinit, :], 0.0)
    y1 = jnp.where(img, y1, 0.0)          # exact-0 ring = padding for cheap op

    cuse = C2 - Cinit
    y2 = None
    if cuse > 0:
        # place x1 (grouped-expanded) on the canvas scratch
        if ratio == 2:
            aslab_ref[0:Cinit, M:M + WOUT] = y1
        else:
            # TODO(synk): ratio > 2 grouped expansion is implemented but untested
            for gi in range(Cinit):
                lo = gi * (ratio - 1)
                hi = min(lo + (ratio - 1), Cnew)
                if lo < hi:
                    aslab_ref[lo:hi, M:M + WOUT] = jnp.broadcast_to(
                        y1[gi:gi + 1, :], (hi - lo, WOUT))
        # cheap operation: depthwise dw x dw conv = full-lane VPU shift-and-add
        dpad = dw // 2
        acc = jnp.zeros((cuse, WOUT), F32)
        for kh in range(dw):
            for kw in range(dw):
                t = kh * dw + kw
                d = (kh - dpad) * WS + (kw - dpad)
                acc = acc + (w2_ref[0:cuse, t:t + 1] *
                             aslab_ref[0:cuse, M + d:M + d + WOUT])
        y2 = jnp.maximum(acc * sb2_ref[0:cuse, :] +
                         sb2_ref[Cnew:Cnew + cuse, :], 0.0)
        y2 = jnp.where(img, y2, 0.0)
    return y1, y2


def _ghost_plain_kernel(x_ref, w1_ref, sb1_ref, w2_ref, sb2_ref, masks_ref,
                        out_ref, im2_ref, aslab_ref,
                        *, C1, Cinit, Cnew, C2, k, dw, ratio, WS, M, WOUT, WTOT):
    CA = aslab_ref.shape[0]
    aslab_ref[:, 0:M] = jnp.zeros((CA, M), F32)       # zero outer slab margins
    aslab_ref[:, WTOT - M:WTOT] = jnp.zeros((CA, M), F32)
    img = masks_ref[0:1, :] != 0.0
    y1, y2 = _main_path(x_ref, w1_ref, sb1_ref, w2_ref, sb2_ref, img,
                        im2_ref, aslab_ref, C1=C1, Cinit=Cinit, Cnew=Cnew,
                        C2=C2, k=k, dw=dw, ratio=ratio, WS=WS, M=M, WOUT=WOUT)
    out_ref[0:Cinit, M:M + WOUT] = y1
    if C2 - Cinit > 0:
        out_ref[Cinit:C2, M:M + WOUT] = y2


def _ghost_attn_kernel(x_ref, w1_ref, sb1_ref, w2_ref, sb2_ref, masks_ref,
                       w3_ref, sb3_ref, w4_ref, sb4_ref, w5_ref, sb5_ref,
                       out_ref, im2_ref, aslab_ref, gslab_ref,
                       *, C1, Cinit, Cnew, C2, k, dw, ratio, dfc_k,
                       WS, M, WOUT, WTOT):
    CA = aslab_ref.shape[0]
    # zero the outer slab margins; any other ring/margin garbage is removed via
    # where-selects (invariant: masks are selects, never multiplies)
    aslab_ref[:, 0:M] = jnp.zeros((CA, M), F32)
    aslab_ref[:, WTOT - M:WTOT] = jnp.zeros((CA, M), F32)
    gslab_ref[:, 0:M] = jnp.zeros((C2, M), F32)
    gslab_ref[:, WTOT - M:WTOT] = jnp.zeros((C2, M), F32)

    img = masks_ref[0:1, :] != 0.0
    col_even = masks_ref[1:2, :] != 0.0
    row_even = masks_ref[2:3, :] != 0.0
    dfp = dfc_k // 2

    # ---- DFC gate at FULL resolution with dilation-2 taps.  Running the
    # pooled-grid chain on the nearest-upsampled pooled input with every tap
    # dilated by 2 (ring kept at exact 0) reproduces
    #   upsample2(sigmoid(BN(dw(5,1)(BN(dw(1,5)(BN(conv3(avgpool2(x)))))))))
    # exactly, so no pooled canvas / selection matrices are needed.
    # Pu = up2(avg_pool2d(x, 2, 2)) via parity-select shift-adds:
    s1 = x_ref[:, M:M + WOUT] + jnp.where(col_even,
                                          x_ref[:, M + 1:M + 1 + WOUT],
                                          x_ref[:, M - 1:M - 1 + WOUT])
    aslab_ref[0:C1, M:M + WOUT] = s1
    s2 = s1 + jnp.where(row_even, aslab_ref[0:C1, M + WS:M + WS + WOUT],
                        aslab_ref[0:C1, M - WS:M - WS + WOUT])
    aslab_ref[0:C1, M:M + WOUT] = jnp.where(img, 0.25 * s2, 0.0)

    # dense k x k conv (C1 -> C2), dilation 2, + BN
    dfc = _conv_im2col(lambda d: aslab_ref[0:C1, M + d:M + d + WOUT],
                       w3_ref, im2_ref, kk=k, cin=C1, WS=WS, WOUT=WOUT, dil=2)
    gslab_ref[:, M:M + WOUT] = jnp.where(
        img, dfc * sb3_ref[0:C2, :] + sb3_ref[C2:2 * C2, :], 0.0)

    # depthwise (1, dfc_k), dilation 2 (horizontal) + BN
    acc = jnp.zeros((C2, WOUT), F32)
    for kw in range(dfc_k):
        d = 2 * (kw - dfp)
        acc = acc + w4_ref[:, kw:kw + 1] * gslab_ref[:, M + d:M + d + WOUT]
    gslab_ref[:, M:M + WOUT] = jnp.where(
        img, acc * sb4_ref[0:C2, :] + sb4_ref[C2:2 * C2, :], 0.0)

    # depthwise (dfc_k, 1), dilation 2 (vertical) + BN + sigmoid
    acc = jnp.zeros((C2, WOUT), F32)
    for kh in range(dfc_k):
        d = 2 * (kh - dfp) * WS
        acc = acc + w5_ref[:, kh:kh + 1] * gslab_ref[:, M + d:M + d + WOUT]
    gslab_ref[:, M:M + WOUT] = jax.nn.sigmoid(
        acc * sb5_ref[0:C2, :] + sb5_ref[C2:2 * C2, :])

    # ---- main path, gating fused into the output stores
    y1, y2 = _main_path(x_ref, w1_ref, sb1_ref, w2_ref, sb2_ref, img,
                        im2_ref, aslab_ref, C1=C1, Cinit=Cinit, Cnew=Cnew,
                        C2=C2, k=k, dw=dw, ratio=ratio, WS=WS, M=M, WOUT=WOUT)
    out_ref[0:Cinit, M:M + WOUT] = y1 * gslab_ref[0:Cinit, M:M + WOUT]
    if C2 - Cinit > 0:
        out_ref[Cinit:C2, M:M + WOUT] = y2 * gslab_ref[Cinit:C2, M:M + WOUT]


# ---------------------------------------------------------------------------
# host-side wrapper (layout plumbing only: padding, masks, weight reshape)
# ---------------------------------------------------------------------------
def ghost_module_v2(x, params, *, c2, k=3, ratio=2, dw_size=3, s=1, dfc_k=5,
                    mode=None):
    assert s == 1            # TODO(synk): strided primary conv not implemented
    assert ratio >= 2
    N, C1, H, W = x.shape
    Cinit = math.ceil(c2 / ratio)
    Cnew = Cinit * (ratio - 1)
    pad, dpad = k // 2, dw_size // 2

    if mode == "attn":
        assert H == W and H % 2 == 0     # F.interpolate(size=W) after 2x pooling
        assert dfc_k == 5                # DFCModule hardcodes padding=(0,2)/(2,0)
        ring = max(pad, dpad, 2 * pad, 2 * (dfc_k // 2))   # dilated taps need 2x
    else:
        ring = max(pad, dpad)

    WS, HS = W + 2 * ring, H + 2 * ring
    LF = HS * WS
    M = ring * (WS + 1)                  # >= any (dilated) tap lane offset
    LFE = LF + 2 * M
    WTOT = N * LFE                       # whole batch folded onto the lane axis
    WOUT = WTOT - 2 * M                  # compute window

    # input: zero-ring canvas per batch element + zero inter-segment margins
    # (wrapper-side jnp.pad / reshape only -- no placement matmul in-kernel)
    xc = jnp.pad(x.astype(F32), ((0, 0), (0, 0), (ring, ring), (ring, ring)))
    xc = jnp.pad(xc.reshape(N, C1, LF), ((0, 0), (0, 0), (M, M)))
    xslab = xc.transpose(1, 0, 2).reshape(C1, WTOT)

    # window masks (0/1 constants; only image positions are ever relied upon)
    rr = jnp.arange(HS)[:, None]
    cc = jnp.arange(WS)[None, :]
    img_can = ((rr >= ring) & (rr < ring + H) &
               (cc >= ring) & (cc < ring + W)).astype(F32)
    col_even_can = jnp.broadcast_to((((cc - ring) % 2) == 0).astype(F32), (HS, WS))
    row_even_can = jnp.broadcast_to((((rr - ring) % 2) == 0).astype(F32), (HS, WS))

    def window(can):                     # (HS, WS) canvas -> (WOUT,) window
        seg = jnp.concatenate([can.reshape(LF), jnp.zeros((2 * M,), F32)])
        return jnp.tile(seg, N)[:WOUT]

    # weights: bf16 (Cout, k*k*Cin) matrices for the MXU, f32 per-channel
    # weights for the VPU; BN folded to scale/bias and packed as (2C, 1)
    w1 = params["w1"].astype(F32).transpose(0, 2, 3, 1).reshape(Cinit, k * k * C1)
    sb1 = jnp.concatenate([params["s1"], params["b1"]]).astype(F32).reshape(-1, 1)
    w2 = params["w2"].astype(F32).reshape(Cnew, dw_size * dw_size)
    sb2 = jnp.concatenate([params["s2"], params["b2"]]).astype(F32).reshape(-1, 1)

    if mode == "attn":
        masks = jnp.stack([window(img_can), window(col_even_can),
                           window(row_even_can)])
    else:
        masks = window(img_can)[None]

    inputs = [xslab, w1.astype(BF16), sb1, w2, sb2, masks]
    static = dict(C1=C1, Cinit=Cinit, Cnew=Cnew, C2=c2, k=k, dw=dw_size,
                  ratio=ratio, WS=WS, M=M, WOUT=WOUT, WTOT=WTOT)
    CA = max(C1, Cnew)
    scratch = [pltpu.VMEM((k * k * C1, WOUT), F32),      # shared im2col buffer
               pltpu.VMEM((CA, WTOT), F32)]              # x1 / pooled-input slab

    if mode == "attn":
        w3 = params["w3"].astype(F32).transpose(0, 2, 3, 1).reshape(c2, k * k * C1)
        sb3 = jnp.concatenate([params["s3"], params["b3"]]).astype(F32).reshape(-1, 1)
        w4 = params["w4"].astype(F32).reshape(c2, dfc_k)
        sb4 = jnp.concatenate([params["s4"], params["b4"]]).astype(F32).reshape(-1, 1)
        w5 = params["w5"].astype(F32).reshape(c2, dfc_k)
        sb5 = jnp.concatenate([params["s5"], params["b5"]]).astype(F32).reshape(-1, 1)
        inputs += [w3.astype(BF16), sb3, w4, sb4, w5, sb5]
        scratch.append(pltpu.VMEM((c2, WTOT), F32))      # DFC intermediate slab
        kernel = functools.partial(_ghost_attn_kernel, dfc_k=dfc_k, **static)
    else:
        kernel = functools.partial(_ghost_plain_kernel, **static)

    in_specs = [pl.BlockSpec(a.shape, functools.partial(_zero_idx, a.ndim))
                for a in inputs]

    out = pl.pallas_call(
        kernel,
        out_shape=jax.ShapeDtypeStruct((c2, WTOT), F32),
        grid=(1,),                       # whole batch in one lane-dense step
        in_specs=in_specs,
        out_specs=pl.BlockSpec((c2, WTOT), lambda i: (0, 0)),
        scratch_shapes=scratch,
        compiler_params=pltpu.CompilerParams(
            dimension_semantics=("arbitrary",),
            vmem_limit_bytes=32 * 1024 * 1024),
    )(*inputs)

    # canvas layout -> NCHW (pure layout plumbing on the XLA side)
    out = out.reshape(c2, N, LFE)[:, :, M:M + LF].reshape(c2, N, HS, WS)
    out = out[:, :, ring:ring + H, ring:ring + W]
    return jnp.transpose(out, (1, 0, 2, 3))


# ---------------------------------------------------------------------------
# deterministic parameter init + pure-JAX reference for checking
# ---------------------------------------------------------------------------
def _fold_bn(gamma, beta, mean, var, eps=1e-5):
    scale = gamma / jnp.sqrt(var + eps)
    return scale, beta - mean * scale


def init_params(key, c1, c2, k=3, ratio=2, dw_size=3, dfc_k=5, mode=None):
    Cinit = math.ceil(c2 / ratio)
    Cnew = Cinit * (ratio - 1)
    keys = jax.random.split(key, 10)

    def conv_w(kk, shape, fan_in):
        return jax.random.normal(kk, shape, jnp.float32) / math.sqrt(fan_in)

    def bn(kk, c):
        k1, k2, k3, k4 = jax.random.split(kk, 4)
        gamma = jax.random.uniform(k1, (c,), jnp.float32, 0.5, 1.5)
        beta = jax.random.normal(k2, (c,), jnp.float32) * 0.1
        mean = jax.random.normal(k3, (c,), jnp.float32) * 0.1
        var = jax.random.uniform(k4, (c,), jnp.float32, 0.5, 1.5)
        return _fold_bn(gamma, beta, mean, var)

    p = {}
    p["w1"] = conv_w(keys[0], (Cinit, c1, k, k), c1 * k * k)
    p["s1"], p["b1"] = bn(keys[1], Cinit)
    p["w2"] = conv_w(keys[2], (Cnew, 1, dw_size, dw_size), dw_size * dw_size)
    p["s2"], p["b2"] = bn(keys[3], Cnew)
    if mode == "attn":
        p["w3"] = conv_w(keys[4], (c2, c1, k, k), c1 * k * k)
        p["s3"], p["b3"] = bn(keys[5], c2)
        p["w4"] = conv_w(keys[6], (c2, 1, 1, dfc_k), dfc_k)
        p["s4"], p["b4"] = bn(keys[7], c2)
        p["w5"] = conv_w(keys[8], (c2, 1, dfc_k, 1), dfc_k)
        p["s5"], p["b5"] = bn(keys[9], c2)
    return p


def reference_forward(x, p, *, c2, k=3, ratio=2, dw_size=3, s=1, dfc_k=5, mode=None):
    dn = ("NCHW", "OIHW", "NCHW")
    Cinit = math.ceil(c2 / ratio)
    pad, dpad = k // 2, dw_size // 2

    def bnf(t, sc, bi):
        return t * sc[None, :, None, None] + bi[None, :, None, None]

    x1 = lax.conv_general_dilated(x, p["w1"], (s, s), [(pad, pad), (pad, pad)],
                                  dimension_numbers=dn)
    x1 = jnp.maximum(bnf(x1, p["s1"], p["b1"]), 0.0)
    x2 = lax.conv_general_dilated(x1, p["w2"], (1, 1), [(dpad, dpad), (dpad, dpad)],
                                  dimension_numbers=dn, feature_group_count=Cinit)
    x2 = jnp.maximum(bnf(x2, p["s2"], p["b2"]), 0.0)
    out = jnp.concatenate([x1, x2], axis=1)[:, :c2]
    if mode == "attn":
        N, C1, H, W = x.shape
        xp = x.reshape(N, C1, H // 2, 2, W // 2, 2).mean(axis=(3, 5))
        t = lax.conv_general_dilated(xp, p["w3"], (s, s), [(pad, pad), (pad, pad)],
                                     dimension_numbers=dn)
        t = bnf(t, p["s3"], p["b3"])
        t = lax.conv_general_dilated(t, p["w4"], (1, 1), [(0, 0), (2, 2)],
                                     dimension_numbers=dn, feature_group_count=c2)
        t = bnf(t, p["s4"], p["b4"])
        t = lax.conv_general_dilated(t, p["w5"], (1, 1), [(2, 2), (0, 0)],
                                     dimension_numbers=dn, feature_group_count=c2)
        t = bnf(t, p["s5"], p["b5"])
        g = jax.nn.sigmoid(t)
        g = jnp.repeat(jnp.repeat(g, 2, axis=2), 2, axis=3)   # nearest 2x upsample
        out = out * g
    return out


if __name__ == "__main__":
    key = jax.random.PRNGKey(0)
    kx, kp = jax.random.split(key)
    N, C1, C2, H, W = 2, 4, 8, 16, 16
    x = jax.random.normal(kx, (N, C1, H, W), jnp.float32)

    for mode in (None, "attn"):
        params = init_params(kp, C1, C2, k=3, ratio=2, dw_size=3, dfc_k=5, mode=mode)
        out = ghost_module_v2(x, params, c2=C2, k=3, ratio=2, dw_size=3, s=1,
                              dfc_k=5, mode=mode)
        out = jax.block_until_ready(out)
        ref = reference_forward(x, params, c2=C2, k=3, ratio=2, dw_size=3, s=1,
                                dfc_k=5, mode=mode)
        assert out.shape == (N, C2, H, W)
        err = float(jnp.max(jnp.abs(out - ref)))
        # bf16 MXU operands -> relaxed (but still bug-catching) tolerance
        assert jnp.allclose(out, ref, atol=5e-2, rtol=5e-2), \
            f"mode={mode} max err {err}"

    print("KERNEL_OK")
</pallas_src>

<mosaic_0001>
module attributes {stable_mosaic.version = 11 : i64} {
  func.func @_ghost_plain_kernel(%arg0: i32, %arg1: memref<4x724xf32, #tpu.memory_space<vmem>>, %arg2: memref<4x36xbf16, #tpu.memory_space<vmem>>, %arg3: memref<8x1xf32, #tpu.memory_space<vmem>>, %arg4: memref<4x9xf32, #tpu.memory_space<vmem>>, %arg5: memref<8x1xf32, #tpu.memory_space<vmem>>, %arg6: memref<1x686xf32, #tpu.memory_space<vmem>>, %arg7: memref<8x724xf32, #tpu.memory_space<vmem>>, %arg8: memref<36x686xf32, #tpu.memory_space<vmem>>, %arg9: memref<4x724xf32, #tpu.memory_space<vmem>>) attributes {dimension_semantics = [#tpu.dimension_semantics<arbitrary>], iteration_bounds = array<i64: 1>, scalar_prefetch = 0 : i64, scratch_operands = 2 : i64, tpu.core_type = #tpu.core_type<tc>, window_params = [{pipeline_mode = #tpu.pipeline_mode<synchronous>, transform_indices = @transform_0, window_bounds = array<i64: 4, 724>}, {pipeline_mode = #tpu.pipeline_mode<synchronous>, transform_indices = @transform_1, window_bounds = array<i64: 4, 36>}, {pipeline_mode = #tpu.pipeline_mode<synchronous>, transform_indices = @transform_2, window_bounds = array<i64: 8, 1>}, {pipeline_mode = #tpu.pipeline_mode<synchronous>, transform_indices = @transform_3, window_bounds = array<i64: 4, 9>}, {pipeline_mode = #tpu.pipeline_mode<synchronous>, transform_indices = @transform_4, window_bounds = array<i64: 8, 1>}, {pipeline_mode = #tpu.pipeline_mode<synchronous>, transform_indices = @transform_5, window_bounds = array<i64: 1, 686>}, {pipeline_mode = #tpu.pipeline_mode<synchronous>, transform_indices = @transform_6, window_bounds = array<i64: 8, 724>}]} {
    %cst = arith.constant 0.000000e+00 : f32
    %0 = vector.broadcast %cst : f32 to vector<4x19xf32>
    %c0 = arith.constant 0 : index
    %c0_0 = arith.constant 0 : index
    %1 = vector.load %arg9[%c0, %c0_0] : memref<4x724xf32, #tpu.memory_space<vmem>>, vector<4x19xf32>
    tpu.vector_store %arg9[%c0, %c0_0], %0 {strides = array<i32>} : memref<4x724xf32, #tpu.memory_space<vmem>>, vector<4x19xf32>,
    %cst_1 = arith.constant 0.000000e+00 : f32
    %2 = vector.broadcast %cst_1 : f32 to vector<4x19xf32>
    %c0_2 = arith.constant 0 : index
    %c705 = arith.constant 705 : index
    %3 = vector.load %arg9[%c0_2, %c705] : memref<4x724xf32, #tpu.memory_space<vmem>>, vector<4x19xf32>
    tpu.vector_store %arg9[%c0_2, %c705], %2 {strides = array<i32>} : memref<4x724xf32, #tpu.memory_space<vmem>>, vector<4x19xf32>,
    %c0_3 = arith.constant 0 : index
    %c0_4 = arith.constant 0 : index
    %4 = vector.load %arg6[%c0_3, %c0_4] : memref<1x686xf32, #tpu.memory_space<vmem>>, vector<1x686xf32>
    %cst_5 = arith.constant 0.000000e+00 : f32
    %5 = vector.broadcast %cst_5 : f32 to vector<1x686xf32>
    %6 = arith.cmpf one, %4, %5 : vector<1x686xf32>
    %c0_6 = arith.constant 0 : index
    %c0_7 = arith.constant 0 : index
    %7 = vector.load %arg1[%c0_6, %c0_7] : memref<4x724xf32, #tpu.memory_space<vmem>>, vector<4x686xf32>
    %c0_8 = arith.constant 0 : index
    %c0_9 = arith.constant 0 : index
    %8 = vector.load %arg8[%c0_8, %c0_9] : memref<36x686xf32, #tpu.memory_space<vmem>>, vector<4x686xf32>
    tpu.vector_store %arg8[%c0_8, %c0_9], %7 {strides = array<i32>} : memref<36x686xf32, #tpu.memory_space<vmem>>, vector<4x686xf32>,
    %c0_10 = arith.constant 0 : index
    %c1 = arith.constant 1 : index
    %9 = vector.load %arg1[%c0_10, %c1] : memref<4x724xf32, #tpu.memory_space<vmem>>, vector<4x686xf32>
    %c4 = arith.constant 4 : index
    %c0_11 = arith.constant 0 : index
    %10 = vector.load %arg8[%c4, %c0_11] : memref<36x686xf32, #tpu.memory_space<vmem>>, vector<4x686xf32>
    tpu.vector_store %arg8[%c4, %c0_11], %9 {strides = array<i32>} : memref<36x686xf32, #tpu.memory_space<vmem>>, vector<4x686xf32>,
    %c0_12 = arith.constant 0 : index
    %c2 = arith.constant 2 : index
    %11 = vector.load %arg1[%c0_12, %c2] : memref<4x724xf32, #tpu.memory_space<vmem>>, vector<4x686xf32>
    %c8 = arith.constant 8 : index
    %c0_13 = arith.constant 0 : index
    %12 = vector.load %arg8[%c8, %c0_13] : memref<36x686xf32, #tpu.memory_space<vmem>>, vector<4x686xf32>
    tpu.vector_store %arg8[%c8, %c0_13], %11 {strides = array<i32>} : memref<36x686xf32, #tpu.memory_space<vmem>>, vector<4x686xf32>,
    %c0_14 = arith.constant 0 : index
    %c18 = arith.constant 18 : index
    %13 = vector.load %arg1[%c0_14, %c18] : memref<4x724xf32, #tpu.memory_space<vmem>>, vector<4x686xf32>
    %c12 = arith.constant 12 : index
    %c0_15 = arith.constant 0 : index
    %14 = vector.load %arg8[%c12, %c0_15] : memref<36x686xf32, #tpu.memory_space<vmem>>, vector<4x686xf32>
    tpu.vector_store %arg8[%c12, %c0_15], %13 {strides = array<i32>} : memref<36x686xf32, #tpu.memory_space<vmem>>, vector<4x686xf32>,
    %c0_16 = arith.constant 0 : index
    %c19 = arith.constant 19 : index
    %15 = vector.load %arg1[%c0_16, %c19] : memref<4x724xf32, #tpu.memory_space<vmem>>, vector<4x686xf32>
    %c16 = arith.constant 16 : index
    %c0_17 = arith.constant 0 : index
    %16 = vector.load %arg8[%c16, %c0_17] : memref<36x686xf32, #tpu.memory_space<vmem>>, vector<4x686xf32>
    tpu.vector_store %arg8[%c16, %c0_17], %15 {strides = array<i32>} : memref<36x686xf32, #tpu.memory_space<vmem>>, vector<4x686xf32>,
    %c0_18 = arith.constant 0 : index
    %c20 = arith.constant 20 : index
    %17 = vector.load %arg1[%c0_18, %c20] : memref<4x724xf32, #tpu.memory_space<vmem>>, vector<4x686xf32>
    %c20_19 = arith.constant 20 : index
    %c0_20 = arith.constant 0 : index
    %18 = vector.load %arg8[%c20_19, %c0_20] : memref<36x686xf32, #tpu.memory_space<vmem>>, vector<4x686xf32>
    tpu.vector_store %arg8[%c20_19, %c0_20], %17 {strides = array<i32>} : memref<36x686xf32, #tpu.memory_space<vmem>>, vector<4x686xf32>,
    %c0_21 = arith.constant 0 : index
    %c36 = arith.constant 36 : index
    %19 = vector.load %arg1[%c0_21, %c36] : memref<4x724xf32, #tpu.memory_space<vmem>>, vector<4x686xf32>
    %c24 = arith.constant 24 : index
    %c0_22 = arith.constant 0 : index
    %20 = vector.load %arg8[%c24, %c0_22] : memref<36x686xf32, #tpu.memory_space<vmem>>, vector<4x686xf32>
    tpu.vector_store %arg8[%c24, %c0_22], %19 {strides = array<i32>} : memref<36x686xf32, #tpu.memory_space<vmem>>, vector<4x686xf32>,
    %c0_23 = arith.constant 0 : index
    %c37 = arith.constant 37 : index
    %21 = vector.load %arg1[%c0_23, %c37] : memref<4x724xf32, #tpu.memory_space<vmem>>, vector<4x686xf32>
    %c28 = arith.constant 28 : index
    %c0_24 = arith.constant 0 : index
    %22 = vector.load %arg8[%c28, %c0_24] : memref<36x686xf32, #tpu.memory_space<vmem>>, vector<4x686xf32>
    tpu.vector_store %arg8[%c28, %c0_24], %21 {strides = array<i32>} : memref<36x686xf32, #tpu.memory_space<vmem>>, vector<4x686xf32>,
    %c0_25 = arith.constant 0 : index
    %c38 = arith.constant 38 : index
    %23 = vector.load %arg1[%c0_25, %c38] : memref<4x724xf32, #tpu.memory_space<vmem>>, vector<4x686xf32>
    %c32 = arith.constant 32 : index
    %c0_26 = arith.constant 0 : index
    %24 = vector.load %arg8[%c32, %c0_26] : memref<36x686xf32, #tpu.memory_space<vmem>>, vector<4x686xf32>
    tpu.vector_store %arg8[%c32, %c0_26], %23 {strides = array<i32>} : memref<36x686xf32, #tpu.memory_space<vmem>>, vector<4x686xf32>,
    %c0_27 = arith.constant 0 : index
    %c0_28 = arith.constant 0 : index
    %25 = vector.load %arg2[%c0_27, %c0_28] : memref<4x36xbf16, #tpu.memory_space<vmem>>, vector<4x36xbf16>
    %c0_29 = arith.constant 0 : index
    %c0_30 = arith.constant 0 : index
    %26 = vector.load %arg8[%c0_29, %c0_30] : memref<36x686xf32, #tpu.memory_space<vmem>>, vector<36x686xf32>
    %27 = arith.truncf %26 : vector<36x686xf32> to vector<36x686xbf16>
    %cst_31 = arith.constant dense<0.000000e+00> : vector<4x686xf32>
    %28 = tpu.matmul %25, %27, %cst_31 {dimension_numbers = #tpu.dot_dimension_numbers<[1], [0], [0], [1], [0, 0, 1, 1], [], []>} : vector<4x36xbf16>, vector<36x686xbf16>, vector<4x686xf32> -> vector<4x686xf32>
    %c0_32 = arith.constant 0 : index
    %c0_33 = arith.constant 0 : index
    %29 = vector.load %arg3[%c0_32, %c0_33] : memref<8x1xf32, #tpu.memory_space<vmem>>, vector<4x1xf32>
    %30 = vector.broadcast %29 : vector<4x1xf32> to vector<4x686xf32>
    %31 = arith.mulf %28, %30 : vector<4x686xf32>
    %c4_34 = arith.constant 4 : index
    %c0_35 = arith.constant 0 : index
    %32 = vector.load %arg3[%c4_34, %c0_35] : memref<8x1xf32, #tpu.memory_space<vmem>>, vector<4x1xf32>
    %33 = vector.broadcast %32 : vector<4x1xf32> to vector<4x686xf32>
    %34 = arith.addf %31, %33 : vector<4x686xf32>
    %cst_36 = arith.constant 0.000000e+00 : f32
    %35 = vector.broadcast %cst_36 : f32 to vector<4x686xf32>
    %36 = arith.maximumf %34, %35 : vector<4x686xf32>
    %cst_37 = arith.constant 0.000000e+00 : f32
    %37 = vector.shape_cast %6 : vector<1x686xi1> to vector<1x686xi1>
    %38 = vector.broadcast %37 : vector<1x686xi1> to vector<4x686xi1>
    %39 = vector.broadcast %cst_37 : f32 to vector<4x686xf32>
    %40 = arith.select %38, %36, %39 : vector<4x686xi1>, vector<4x686xf32>
    %c0_38 = arith.constant 0 : index
    %c19_39 = arith.constant 19 : index
    %41 = vector.load %arg9[%c0_38, %c19_39] : memref<4x724xf32, #tpu.memory_space<vmem>>, vector<4x686xf32>
    tpu.vector_store %arg9[%c0_38, %c19_39], %40 {strides = array<i32>} : memref<4x724xf32, #tpu.memory_space<vmem>>, vector<4x686xf32>,
    %cst_40 = arith.constant 0.000000e+00 : f32
    %42 = vector.broadcast %cst_40 : f32 to vector<4x686xf32>
    %c0_41 = arith.constant 0 : index
    %c0_42 = arith.constant 0 : index
    %43 = vector.load %arg4[%c0_41, %c0_42] : memref<4x9xf32, #tpu.memory_space<vmem>>, vector<4x1xf32>
    %c0_43 = arith.constant 0 : index
    %c0_44 = arith.constant 0 : index
    %44 = vector.load %arg9[%c0_43, %c0_44] : memref<4x724xf32, #tpu.memory_space<vmem>>, vector<4x686xf32>
    %45 = vector.broadcast %43 : vector<4x1xf32> to vector<4x686xf32>
    %46 = arith.mulf %45, %44 : vector<4x686xf32>
    %47 = arith.addf %42, %46 : vector<4x686xf32>
    %c0_45 = arith.constant 0 : index
    %c1_46 = arith.constant 1 : index
    %48 = vector.load %arg4[%c0_45, %c1_46] : memref<4x9xf32, #tpu.memory_space<vmem>>, vector<4x1xf32>
    %c0_47 = arith.constant 0 : index
    %c1_48 = arith.constant 1 : index
    %49 = vector.load %arg9[%c0_47, %c1_48] : memref<4x724xf32, #tpu.memory_space<vmem>>, vector<4x686xf32>
    %50 = vector.broadcast %48 : vector<4x1xf32> to vector<4x686xf32>
    %51 = arith.mulf %50, %49 : vector<4x686xf32>
    %52 = arith.addf %47, %51 : vector<4x686xf32>
    %c0_49 = arith.constant 0 : index
    %c2_50 = arith.constant 2 : index
    %53 = vector.load %arg4[%c0_49, %c2_50] : memref<4x9xf32, #tpu.memory_space<vmem>>, vector<4x1xf32>
    %c0_51 = arith.constant 0 : index
    %c2_52 = arith.constant 2 : index
    %54 = vector.load %arg9[%c0_51, %c2_52] : memref<4x724xf32, #tpu.memory_space<vmem>>, vector<4x686xf32>
    %55 = vector.broadcast %53 : vector<4x1xf32> to vector<4x686xf32>
    %56 = arith.mulf %55, %54 : vector<4x686xf32>
    %57 = arith.addf %52, %56 : vector<4x686xf32>
    %c0_53 = arith.constant 0 : index
    %c3 = arith.constant 3 : index
    %58 = vector.load %arg4[%c0_53, %c3] : memref<4x9xf32, #tpu.memory_space<vmem>>, vector<4x1xf32>
    %c0_54 = arith.constant 0 : index
    %c18_55 = arith.constant 18 : index
    %59 = vector.load %arg9[%c0_54, %c18_55] : memref<4x724xf32, #tpu.memory_space<vmem>>, vector<4x686xf32>
    %60 = vector.broadcast %58 : vector<4x1xf32> to vector<4x686xf32>
    %61 = arith.mulf %60, %59 : vector<4x686xf32>
    %62 = arith.addf %57, %61 : vector<4x686xf32>
    %c0_56 = arith.constant 0 : index
    %c4_57 = arith.constant 4 : index
    %63 = vector.load %arg4[%c0_56, %c4_57] : memref<4x9xf32, #tpu.memory_space<vmem>>, vector<4x1xf32>
    %c0_58 = arith.constant 0 : index
    %c19_59 = arith.constant 19 : index
    %64 = vector.load %arg9[%c0_58, %c19_59] : memref<4x724xf32, #tpu.memory_space<vmem>>, vector<4x686xf32>
    %65 = vector.broadcast %63 : vector<4x1xf32> to vector<4x686xf32>
    %66 = arith.mulf %65, %64 : vector<4x686xf32>
    %67 = arith.addf %62, %66 : vector<4x686xf32>
    %c0_60 = arith.constant 0 : index
    %c5 = arith.constant 5 : index
    %68 = vector.load %arg4[%c0_60, %c5] : memref<4x9xf32, #tpu.memory_space<vmem>>, vector<4x1xf32>
    %c0_61 = arith.constant 0 : index
    %c20_62 = arith.constant 20 : index
    %69 = vector.load %arg9[%c0_61, %c20_62] : memref<4x724xf32, #tpu.memory_space<vmem>>, vector<4x686xf32>
    %70 = vector.broadcast %68 : vector<4x1xf32> to vector<4x686xf32>
    %71 = arith.mulf %70, %69 : vector<4x686xf32>
    %72 = arith.addf %67, %71 : vector<4x686xf32>
    %c0_63 = arith.constant 0 : index
    %c6 = arith.constant 6 : index
    %73 = vector.load %arg4[%c0_63, %c6] : memref<4x9xf32, #tpu.memory_space<vmem>>, vector<4x1xf32>
    %c0_64 = arith.constant 0 : index
    %c36_65 = arith.constant 36 : index
    %74 = vector.load %arg9[%c0_64, %c36_65] : memref<4x724xf32, #tpu.memory_space<vmem>>, vector<4x686xf32>
    %75 = vector.broadcast %73 : vector<4x1xf32> to vector<4x686xf32>
    %76 = arith.mulf %75, %74 : vector<4x686xf32>
    %77 = arith.addf %72, %76 : vector<4x686xf32>
    %c0_66 = arith.constant 0 : index
    %c7 = arith.constant 7 : index
    %78 = vector.load %arg4[%c0_66, %c7] : memref<4x9xf32, #tpu.memory_space<vmem>>, vector<4x1xf32>
    %c0_67 = arith.constant 0 : index
    %c37_68 = arith.constant 37 : index
    %79 = vector.load %arg9[%c0_67, %c37_68] : memref<4x724xf32, #tpu.memory_space<vmem>>, vector<4x686xf32>
    %80 = vector.broadcast %78 : vector<4x1xf32> to vector<4x686xf32>
    %81 = arith.mulf %80, %79 : vector<4x686xf32>
    %82 = arith.addf %77, %81 : vector<4x686xf32>
    %c0_69 = arith.constant 0 : index
    %c8_70 = arith.constant 8 : index
    %83 = vector.load %arg4[%c0_69, %c8_70] : memref<4x9xf32, #tpu.memory_space<vmem>>, vector<4x1xf32>
    %c0_71 = arith.constant 0 : index
    %c38_72 = arith.constant 38 : index
    %84 = vector.load %arg9[%c0_71, %c38_72] : memref<4x724xf32, #tpu.memory_space<vmem>>, vector<4x686xf32>
    %85 = vector.broadcast %83 : vector<4x1xf32> to vector<4x686xf32>
    %86 = arith.mulf %85, %84 : vector<4x686xf32>
    %87 = arith.addf %82, %86 : vector<4x686xf32>
    %c0_73 = arith.constant 0 : index
    %c0_74 = arith.constant 0 : index
    %88 = vector.load %arg5[%c0_73, %c0_74] : memref<8x1xf32, #tpu.memory_space<vmem>>, vector<4x1xf32>
    %89 = vector.broadcast %88 : vector<4x1xf32> to vector<4x686xf32>
    %90 = arith.mulf %87, %89 : vector<4x686xf32>
    %c4_75 = arith.constant 4 : index
    %c0_76 = arith.constant 0 : index
    %91 = vector.load %arg5[%c4_75, %c0_76] : memref<8x1xf32, #tpu.memory_space<vmem>>, vector<4x1xf32>
    %92 = vector.broadcast %91 : vector<4x1xf32> to vector<4x686xf32>
    %93 = arith.addf %90, %92 : vector<4x686xf32>
    %cst_77 = arith.constant 0.000000e+00 : f32
    %94 = vector.broadcast %cst_77 : f32 to vector<4x686xf32>
    %95 = arith.maximumf %93, %94 : vector<4x686xf32>
    %cst_78 = arith.constant 0.000000e+00 : f32
    %96 = vector.shape_cast %6 : vector<1x686xi1> to vector<1x686xi1>
    %97 = vector.broadcast %96 : vector<1x686xi1> to vector<4x686xi1>
    %98 = vector.broadcast %cst_78 : f32 to vector<4x686xf32>
    %99 = arith.select %97, %95, %98 : vector<4x686xi1>, vector<4x686xf32>
    %c0_79 = arith.constant 0 : index
    %c19_80 = arith.constant 19 : index
    %100 = vector.load %arg7[%c0_79, %c19_80] : memref<8x724xf32, #tpu.memory_space<vmem>>, vector<4x686xf32>
    tpu.vector_store %arg7[%c0_79, %c19_80], %40 {strides = array<i32>} : memref<8x724xf32, #tpu.memory_space<vmem>>, vector<4x686xf32>,
    %c4_81 = arith.constant 4 : index
    %c19_82 = arith.constant 19 : index
    %101 = vector.load %arg7[%c4_81, %c19_82] : memref<8x724xf32, #tpu.memory_space<vmem>>, vector<4x686xf32>
    tpu.vector_store %arg7[%c4_81, %c19_82], %99 {strides = array<i32>} : memref<8x724xf32, #tpu.memory_space<vmem>>, vector<4x686xf32>,
    return
  }
  func.func @transform_0(%arg0: i32) -> (i32, i32) {
    %c0_i32 = arith.constant 0 : i32
    %c0_i32_0 = arith.constant 0 : i32
    %c0_i32_1 = arith.constant 0 : i32
    return %c0_i32, %c0_i32_0 : i32, i32
  }
  func.func @transform_1(%arg0: i32) -> (i32, i32) {
    %c0_i32 = arith.constant 0 : i32
    %c0_i32_0 = arith.constant 0 : i32
    %c0_i32_1 = arith.constant 0 : i32
    return %c0_i32, %c0_i32_0 : i32, i32
  }
  func.func @transform_2(%arg0: i32) -> (i32, i32) {
    %c0_i32 = arith.constant 0 : i32
    %c0_i32_0 = arith.constant 0 : i32
    %c0_i32_1 = arith.constant 0 : i32
    return %c0_i32, %c0_i32_0 : i32, i32
  }
  func.func @transform_3(%arg0: i32) -> (i32, i32) {
    %c0_i32 = arith.constant 0 : i32
    %c0_i32_0 = arith.constant 0 : i32
    %c0_i32_1 = arith.constant 0 : i32
    return %c0_i32, %c0_i32_0 : i32, i32
  }
  func.func @transform_4(%arg0: i32) -> (i32, i32) {
    %c0_i32 = arith.constant 0 : i32
    %c0_i32_0 = arith.constant 0 : i32
    %c0_i32_1 = arith.constant 0 : i32
    return %c0_i32, %c0_i32_0 : i32, i32
  }
  func.func @transform_5(%arg0: i32) -> (i32, i32) {
    %c0_i32 = arith.constant 0 : i32
    %c0_i32_0 = arith.constant 0 : i32
    %c0_i32_1 = arith.constant 0 : i32
    return %c0_i32, %c0_i32_0 : i32, i32
  }
  func.func @transform_6(%arg0: i32) -> (i32, i32) {
    %c0_i32 = arith.constant 0 : i32
    %c0_i32_0 = arith.constant 0 : i32
    %c0_i32_1 = arith.constant 0 : i32
    return %c0_i32, %c0_i32_0 : i32, i32
  }
}

</mosaic_0001>

<llo_original>
// kernel: tpu_custom_call.1
$region0: #{tpu_custom_call.1}
  #allocation0 [shape = 'u32[]', space=smem, size = 0x4, offset = 0x4, fixed_abs, tag = 'smem constant byte address 0x4 - core index']
  #allocation1 [shape = 'u32[144,128]{1,0:T(1,128)}', space=vmem, size = 0x12000, scoped, tag = 'internal scratch']
  #allocation2 [shape = 'f32[36,686]{1,0:T(8,128)}', space=vmem, size = 0x1e000, scoped, tag = 'scratch operand']
  #allocation3 [shape = 'f32[4,724]{1,0:T(4,128)}', space=vmem, size = 0x3000, scoped, tag = 'scratch operand']
  %s0 = inlined_call_operand.hbm [shape: f32[4,724], index: 0, kind: input, shape index: {}]
  %s1 = inlined_call_operand.vmem [shape: bf16[4,36], index: 1, kind: input, shape index: {}]
  %s2 = inlined_call_operand.vmem [shape: f32[8,1], index: 2, kind: input, shape index: {}]
  %s3 = inlined_call_operand.vmem [shape: f32[4,9], index: 3, kind: input, shape index: {}]
  %s4 = inlined_call_operand.vmem [shape: f32[8,1], index: 4, kind: input, shape index: {}]
  %s5 = inlined_call_operand.vmem [shape: f32[1,686], index: 5, kind: input, shape index: {}]
  %s6 = inlined_call_operand.hbm [shape: f32[8,724], index: 6, kind: output, shape index: {}]
  %s7 = sld [smem:[#allocation0]]
  $region38: #{tpu_custom_call.1} parent=0
    _
  %s9 = ssub.s32 1, %s7
  %s10 = scalar_select 0, %s9, %s7
  $region1: #{tpu_custom_call.1} parent=0
    #allocation4 [shape = 'u8[12288]{0}', space=vmem, size = 0x3000, scoped, tag = 'input window, operand 0, single buffered']
    #allocation5 [shape = 's32[1]{0}', space=sflag, size = 0x4, scoped, tag = 'scoped memory for tpu_custom_call.1']
    #allocation6 [shape = 's32[1]{0}', space=sflag, size = 0x4, scoped, tag = 'scoped memory for tpu_custom_call.1']
    #allocation7 [shape = 'u8[24576]{0}', space=vmem, size = 0x6000, scoped, tag = 'output window, operand 0, single buffered']
    %11 = vsyncpa [#allocation5], 0
    %12 = vsyncpa [#allocation6], 0
    // Predicated region
    $region2: #{tpu_custom_call.1} parent=1 // pred_check
      _
    $region3: #{tpu_custom_call.1} parent=1 // pred_check_branch
      %14 = sbr.rel (0) target = $region5
    $region4: #{tpu_custom_call.1} parent=1 // pred_region
      %s16 = ssub.s32 384, 384
      %17 = vsyncadd [#allocation5], %s16
      %s19 = sshll.u32 [#allocation4], 4
      %s20 = int_to_ptr.vmem [resolvable:$true] %s19
      %22 = dma.hbm_to_vmem [thread:$0]  %s0, 384, %s20, [#allocation5]
    $region5: #{tpu_custom_call.1} parent=1 // pred_fallthru
      _
    // Predicated region
    $region6: #{tpu_custom_call.1} parent=1 // pred_check
      _
    $region7: #{tpu_custom_call.1} parent=1 // pred_check_branch
      %24 = sbr.rel (0) target = $region9
    $region8: #{tpu_custom_call.1} parent=1 // pred_region
      _
    $region9: #{tpu_custom_call.1} parent=1 // pred_fallthru
      _
    // Predicated region
    $region10: #{tpu_custom_call.1} parent=1 // pred_check
      _
    $region11: #{tpu_custom_call.1} parent=1 // pred_check_branch
      %26 = sbr.rel (0) target = $region13
    $region12: #{tpu_custom_call.1} parent=1 // pred_region
      _
    $region13: #{tpu_custom_call.1} parent=1 // pred_fallthru
      _
    // Predicated region
    $region14: #{tpu_custom_call.1} parent=1 // pred_check
      _
    $region15: #{tpu_custom_call.1} parent=1 // pred_check_branch
      %28 = sbr.rel (0) target = $region17
    $region16: #{tpu_custom_call.1} parent=1 // pred_region
      _
    $region17: #{tpu_custom_call.1} parent=1 // pred_fallthru
      _
    // Predicated region
    $region18: #{tpu_custom_call.1} parent=1 // pred_check
      _
    $region19: #{tpu_custom_call.1} parent=1 // pred_check_branch
      %30 = sbr.rel (0) target = $region21
    $region20: #{tpu_custom_call.1} parent=1 // pred_region
      _
    $region21: #{tpu_custom_call.1} parent=1 // pred_fallthru
      _
    // Predicated region
    $region22: #{tpu_custom_call.1} parent=1 // pred_check
      _
    $region23: #{tpu_custom_call.1} parent=1 // pred_check_branch
      %32 = sbr.rel (0) target = $region25
    $region24: #{tpu_custom_call.1} parent=1 // pred_region
      _
    $region25: #{tpu_custom_call.1} parent=1 // pred_fallthru
      _
    // Predicated region
    $region26: #{tpu_custom_call.1} parent=1 // pred_check
      _
    $region27: #{tpu_custom_call.1} parent=1 // pred_check_branch
      %34 = sbr.rel (0) target = $region29
    $region28: #{tpu_custom_call.1} parent=1 // pred_region
      %35 = dma.done [#allocation5], 384
    $region29: #{tpu_custom_call.1} parent=1 // pred_fallthru
      _
    %vm37 = vcmask 150528
    %38 = vst.msk [vmem:[#allocation3] sm:$0xf] %vm37, 0.0
    %vm39 = vcmask 683528
    %40 = vst.msk [vmem:[#allocation3 + $0x14] sm:$0xf] %vm39, 0.0
    %v41 = vld [vmem:[%s5] sm:$0x3f]
    %vm42 = vcmp.ne.f32.partialorder %v41, 0.0
    %v43 = vld [vmem:[#allocation4] sm:$0xff]
    %v44 = vld [vmem:[#allocation4 + $0x8] sm:$0xff]
    %v45 = vld [vmem:[#allocation4 + $0x10] sm:$0xff]
    %v49 = vcombine.high %v43, %v43
    %v50 = vcombine.high %v44, %v44
    %v51 = vcombine.high %v45, %v45
    %55 = vst [vmem:[#allocation2] sm:$0xf] %v43
    %56 = vst [vmem:[#allocation2 + $0x8] sm:$0xf] %v49
    %57 = vst [vmem:[#allocation2 + $0x10] sm:$0xf] %v44
    %58 = vst [vmem:[#allocation2 + $0x18] sm:$0xf] %v50
    %59 = vst [vmem:[#allocation2 + $0x20] sm:$0xf] %v45
    %vm60 = vcmask 371712
    %61 = vst.msk [vmem:[#allocation2 + $0x28] sm:$0xf] %vm60, %v51
    %v62 = vld [vmem:[#allocation4] sm:$0xff]
    %v63 = vld [vmem:[#allocation4 + $0x8] sm:$0xff]
    %v64 = vld [vmem:[#allocation4 + $0x10] sm:$0xff]
    %v68 = vcombine.low %v62, %v62
    %v69 = vcombine.low %v63, %v63
    %v70 = vcombine.low %v64, %v64
    %71 = vrot.lane.b32.xlu0 %v68, 127
    %v72 = vpop.permute.xlu0 %71
    %73 = vrot.lane.b32.xlu0 %v62, 127
    %v74 = vpop.permute.xlu0 %73
    %75 = vrot.lane.b32.xlu0 %v69, 127
    %v76 = vpop.permute.xlu0 %75
    %77 = vrot.lane.b32.xlu0 %v63, 127
    %v78 = vpop.permute.xlu0 %77
    %79 = vrot.lane.b32.xlu0 %v70, 127
    %v80 = vpop.permute.xlu0 %79
    %81 = vrot.lane.b32.xlu0 %v64, 127
    %v82 = vpop.permute.xlu0 %81
    %vm83 = vcmask 1039360
    %v84 = vsel %vm83, %v72, %v74
    %v85 = vsel %vm83, %v74, %v76
    %v86 = vsel %vm83, %v76, %v78
    %v87 = vsel %vm83, %v78, %v80
    %v88 = vsel %vm83, %v80, %v82
    %95 = vst [vmem:[#allocation2] sm:$0xf0] %v84
    %96 = vst [vmem:[#allocation2 + $0x8] sm:$0xf0] %v85
    %97 = vst [vmem:[#allocation2 + $0x10] sm:$0xf0] %v86
    %98 = vst [vmem:[#allocation2 + $0x18] sm:$0xf0] %v87
    %99 = vst [vmem:[#allocation2 + $0x20] sm:$0xf0] %v88
    %vm100 = vcmask 375812
    %101 = vst.msk [vmem:[#allocation2 + $0x28] sm:$0xf0] %vm100, %v82
    %v102 = vld [vmem:[#allocation4] sm:$0xff]
    %v103 = vld [vmem:[#allocation4 + $0x8] sm:$0xff]
    %v104 = vld [vmem:[#allocation4 + $0x10] sm:$0xff]
    %v108 = vcombine.high %v102, %v102
    %v109 = vcombine.high %v103, %v103
    %v110 = vcombine.high %v104, %v104
    %111 = vrot.lane.b32.xlu0 %v102, 126
    %v112 = vpop.permute.xlu0 %111
    %113 = vrot.lane.b32.xlu0 %v108, 126
    %v114 = vpop.permute.xlu0 %113
    %115 = vrot.lane.b32.xlu0 %v103, 126
    %v116 = vpop.permute.xlu0 %115
    %117 = vrot.lane.b32.xlu0 %v109, 126
    %v118 = vpop.permute.xlu0 %117
    %119 = vrot.lane.b32.xlu0 %v104, 126
    %v120 = vpop.permute.xlu0 %119
    %121 = vrot.lane.b32.xlu0 %v110, 126
    %v122 = vpop.permute.xlu0 %121
    %vm123 = vcmask 1031168
    %v124 = vsel %vm123, %v112, %v114
    %v125 = vsel %vm123, %v114, %v116
    %v126 = vsel %vm123, %v116, %v118
    %v127 = vsel %vm123, %v118, %v120
    %v128 = vsel %vm123, %v120, %v122
    %135 = vst [vmem:[#allocation2 + $0x30] sm:$0xf] %v124
    %136 = vst [vmem:[#allocation2 + $0x38] sm:$0xf] %v125
    %137 = vst [vmem:[#allocation2 + $0x40] sm:$0xf] %v126
    %138 = vst [vmem:[#allocation2 + $0x48] sm:$0xf] %v127
    %139 = vst [vmem:[#allocation2 + $0x50] sm:$0xf] %v128
    %140 = vst.msk [vmem:[#allocation2 + $0x58] sm:$0xf] %vm60, %v122
    %v141 = vld [vmem:[#allocation4] sm:$0xff]
    %v142 = vld [vmem:[#allocation4 + $0x8] sm:$0xff]
    %v143 = vld [vmem:[#allocation4 + $0x10] sm:$0xff]
    %v147 = vcombine.low %v141, %v141
    %v148 = vcombine.low %v142, %v142
    %v149 = vcombine.low %v143, %v143
    %150 = vrot.lane.b32.xlu0 %v147, 110
    %v151 = vpop.permute.xlu0 %150
    %152 = vrot.lane.b32.xlu0 %v141, 110
    %v153 = vpop.permute.xlu0 %152
    %154 = vrot.lane.b32.xlu0 %v148, 110
    %v155 = vpop.permute.xlu0 %154
    %156 = vrot.lane.b32.xlu0 %v142, 110
    %v157 = vpop.permute.xlu0 %156
    %158 = vrot.lane.b32.xlu0 %v149, 110
    %v159 = vpop.permute.xlu0 %158
    %160 = vrot.lane.b32.xlu0 %v143, 110
    %v161 = vpop.permute.xlu0 %160
    %vm162 = vcmask 900096
    %v163 = vsel %vm162, %v151, %v153
    %v164 = vsel %vm162, %v153, %v155
    %v165 = vsel %vm162, %v155, %v157
    %v166 = vsel %vm162, %v157, %v159
    %v167 = vsel %vm162, %v159, %v161
    %174 = vst [vmem:[#allocation2 + $0x30] sm:$0xf0] %v163
    %175 = vst [vmem:[#allocation2 + $0x38] sm:$0xf0] %v164
    %176 = vst [vmem:[#allocation2 + $0x40] sm:$0xf0] %v165
    %177 = vst [vmem:[#allocation2 + $0x48] sm:$0xf0] %v166
    %178 = vst [vmem:[#allocation2 + $0x50] sm:$0xf0] %v167
    %179 = vst.msk [vmem:[#allocation2 + $0x58] sm:$0xf0] %vm100, %v161
    %v180 = vld [vmem:[#allocation4] sm:$0xff]
    %v181 = vld [vmem:[#allocation4 + $0x8] sm:$0xff]
    %v182 = vld [vmem:[#allocation4 + $0x10] sm:$0xff]
    %v186 = vcombine.high %v180, %v180
    %v187 = vcombine.high %v181, %v181
    %v188 = vcombine.high %v182, %v182
    %189 = vrot.lane.b32.xlu0 %v180, 109
    %v190 = vpop.permute.xlu0 %189
    %191 = vrot.lane.b32.xlu0 %v186, 109
    %v192 = vpop.permute.xlu0 %191
    %193 = vrot.lane.b32.xlu0 %v181, 109
    %v194 = vpop.permute.xlu0 %193
    %195 = vrot.lane.b32.xlu0 %v187, 109
    %v196 = vpop.permute.xlu0 %195
    %197 = vrot.lane.b32.xlu0 %v182, 109
    %v198 = vpop.permute.xlu0 %197
    %199 = vrot.lane.b32.xlu0 %v188, 109
    %v200 = vpop.permute.xlu0 %199
    %vm201 = vcmask 891904
    %v202 = vsel %vm201, %v190, %v192
    %v203 = vsel %vm201, %v192, %v194
    %v204 = vsel %vm201, %v194, %v196
    %v205 = vsel %vm201, %v196, %v198
    %v206 = vsel %vm201, %v198, %v200
    %213 = vst [vmem:[#allocation2 + $0x60] sm:$0xf] %v202
    %214 = vst [vmem:[#allocation2 + $0x68] sm:$0xf] %v203
    %215 = vst [vmem:[#allocation2 + $0x70] sm:$0xf] %v204
    %216 = vst [vmem:[#allocation2 + $0x78] sm:$0xf] %v205
    %217 = vst [vmem:[#allocation2 + $0x80] sm:$0xf] %v206
    %218 = vst.msk [vmem:[#allocation2 + $0x88] sm:$0xf] %vm60, %v200
    %v219 = vld [vmem:[#allocation4] sm:$0xff]
    %v220 = vld [vmem:[#allocation4 + $0x8] sm:$0xff]
    %v221 = vld [vmem:[#allocation4 + $0x10] sm:$0xff]
    %v225 = vcombine.low %v219, %v219
    %v226 = vcombine.low %v220, %v220
    %v227 = vcombine.low %v221, %v221
    %228 = vrot.lane.b32.xlu0 %v225, 108
    %v229 = vpop.permute.xlu0 %228
    %230 = vrot.lane.b32.xlu0 %v219, 108
    %v231 = vpop.permute.xlu0 %230
    %232 = vrot.lane.b32.xlu0 %v226, 108
    %v233 = vpop.permute.xlu0 %232
    %234 = vrot.lane.b32.xlu0 %v220, 108
    %v235 = vpop.permute.xlu0 %234
    %236 = vrot.lane.b32.xlu0 %v227, 108
    %v237 = vpop.permute.xlu0 %236
    %238 = vrot.lane.b32.xlu0 %v221, 108
    %v239 = vpop.permute.xlu0 %238
    %vm240 = vcmask 883712
    %v241 = vsel %vm240, %v229, %v231
    %v242 = vsel %vm240, %v231, %v233
    %v243 = vsel %vm240, %v233, %v235
    %v244 = vsel %vm240, %v235, %v237
    %v245 = vsel %vm240, %v237, %v239
    %252 = vst [vmem:[#allocation2 + $0x60] sm:$0xf0] %v241
    %253 = vst [vmem:[#allocation2 + $0x68] sm:$0xf0] %v242
    %254 = vst [vmem:[#allocation2 + $0x70] sm:$0xf0] %v243
    %255 = vst [vmem:[#allocation2 + $0x78] sm:$0xf0] %v244
    %256 = vst [vmem:[#allocation2 + $0x80] sm:$0xf0] %v245
    %257 = vst.msk [vmem:[#allocation2 + $0x88] sm:$0xf0] %vm100, %v239
    %v258 = vld [vmem:[#allocation4] sm:$0xff]
    %v259 = vld [vmem:[#allocation4 + $0x8] sm:$0xff]
    %v260 = vld [vmem:[#allocation4 + $0x10] sm:$0xff]
    %v264 = vcombine.high %v258, %v258
    %v265 = vcombine.high %v259, %v259
    %v266 = vcombine.high %v260, %v260
    %267 = vrot.lane.b32.xlu0 %v258, 92
    %v268 = vpop.permute.xlu0 %267
    %269 = vrot.lane.b32.xlu0 %v264, 92
    %v270 = vpop.permute.xlu0 %269
    %271 = vrot.lane.b32.xlu0 %v259, 92
    %v272 = vpop.permute.xlu0 %271
    %273 = vrot.lane.b32.xlu0 %v265, 92
    %v274 = vpop.permute.xlu0 %273
    %275 = vrot.lane.b32.xlu0 %v260, 92
    %v276 = vpop.permute.xlu0 %275
    %277 = vrot.lane.b32.xlu0 %v266, 92
    %v278 = vpop.permute.xlu0 %277
    %vm279 = vcmask 752640
    %v280 = vsel %vm279, %v268, %v270
    %v281 = vsel %vm279, %v270, %v272
    %v282 = vsel %vm279, %v272, %v274
    %v283 = vsel %vm279, %v274, %v276
    %v284 = vsel %vm279, %v276, %v278
    %291 = vst [vmem:[#allocation2 + $0x90] sm:$0xf] %v280
    %292 = vst [vmem:[#allocation2 + $0x98] sm:$0xf] %v281
    %293 = vst [vmem:[#allocation2 + $0xa0] sm:$0xf] %v282
    %294 = vst [vmem:[#allocation2 + $0xa8] sm:$0xf] %v283
    %295 = vst [vmem:[#allocation2 + $0xb0] sm:$0xf] %v284
    %296 = vst.msk [vmem:[#allocation2 + $0xb8] sm:$0xf] %vm60, %v278
    %v297 = vld [vmem:[#allocation4] sm:$0xff]
    %v298 = vld [vmem:[#allocation4 + $0x8] sm:$0xff]
    %v299 = vld [vmem:[#allocation4 + $0x10] sm:$0xff]
    %v303 = vcombine.low %v297, %v297
    %v304 = vcombine.low %v298, %v298
    %v305 = vcombine.low %v299, %v299
    %306 = vrot.lane.b32.xlu0 %v303, 91
    %v307 = vpop.permute.xlu0 %306
    %308 = vrot.lane.b32.xlu0 %v297, 91
    %v309 = vpop.permute.xlu0 %308
    %310 = vrot.lane.b32.xlu0 %v304, 91
    %v311 = vpop.permute.xlu0 %310
    %312 = vrot.lane.b32.xlu0 %v298, 91
    %v313 = vpop.permute.xlu0 %312
    %314 = vrot.lane.b32.xlu0 %v305, 91
    %v315 = vpop.permute.xlu0 %314
    %316 = vrot.lane.b32.xlu0 %v299, 91
    %v317 = vpop.permute.xlu0 %316
    %vm318 = vcmask 744448
    %v319 = vsel %vm318, %v307, %v309
    %v320 = vsel %vm318, %v309, %v311
    %v321 = vsel %vm318, %v311, %v313
    %v322 = vsel %vm318, %v313, %v315
    %v323 = vsel %vm318, %v315, %v317
    %330 = vst [vmem:[#allocation2 + $0x90] sm:$0xf0] %v319
    %331 = vst [vmem:[#allocation2 + $0x98] sm:$0xf0] %v320
    %332 = vst [vmem:[#allocation2 + $0xa0] sm:$0xf0] %v321
    %333 = vst [vmem:[#allocation2 + $0xa8] sm:$0xf0] %v322
    %334 = vst [vmem:[#allocation2 + $0xb0] sm:$0xf0] %v323
    %335 = vst.msk [vmem:[#allocation2 + $0xb8] sm:$0xf0] %vm100, %v317
    %v336 = vld [vmem:[#allocation4] sm:$0xff]
    %v337 = vld [vmem:[#allocation4 + $0x8] sm:$0xff]
    %v338 = vld [vmem:[#allocation4 + $0x10] sm:$0xff]
    %v342 = vcombine.high %v336, %v336
    %v343 = vcombine.high %v337, %v337
    %v344 = vcombine.high %v338, %v338
    %345 = vrot.lane.b32.xlu0 %v336, 90
    %v346 = vpop.permute.xlu0 %345
    %347 = vrot.lane.b32.xlu0 %v342, 90
    %v348 = vpop.permute.xlu0 %347
    %349 = vrot.lane.b32.xlu0 %v337, 90
    %v350 = vpop.permute.xlu0 %349
    %351 = vrot.lane.b32.xlu0 %v343, 90
    %v352 = vpop.permute.xlu0 %351
    %353 = vrot.lane.b32.xlu0 %v338, 90
    %v354 = vpop.permute.xlu0 %353
    %355 = vrot.lane.b32.xlu0 %v344, 90
    %v356 = vpop.permute.xlu0 %355
    %vm357 = vcmask 736256
    %v358 = vsel %vm357, %v346, %v348
    %v359 = vsel %vm357, %v348, %v350
    %v360 = vsel %vm357, %v350, %v352
    %v361 = vsel %vm357, %v352, %v354
    %v362 = vsel %vm357, %v354, %v356
    %369 = vst [vmem:[#allocation2 + $0xc0] sm:$0xf] %v358
    %370 = vst [vmem:[#allocation2 + $0xc8] sm:$0xf] %v359
    %371 = vst [vmem:[#allocation2 + $0xd0] sm:$0xf] %v360
    %372 = vst [vmem:[#allocation2 + $0xd8] sm:$0xf] %v361
    %373 = vst [vmem:[#allocation2 + $0xe0] sm:$0xf] %v362
    %374 = vst.msk [vmem:[#allocation2 + $0xe8] sm:$0xf] %vm60, %v356
    %v375 = vld [vmem:[%s1] sm:$0x3]
    %v376 = vld [vmem:[#allocation2] sm:$0xff]
    %v377 = vld [vmem:[#allocation2 + $0x8] sm:$0xff]
    %v378 = vld [vmem:[#allocation2 + $0x10] sm:$0xff]
    %v379 = vld [vmem:[#allocation2 + $0x18] sm:$0xff]
    %v380 = vld [vmem:[#allocation2 + $0x20] sm:$0xff]
    %v381 = vld [vmem:[#allocation2 + $0x28] sm:$0xff]
    %v382 = vld [vmem:[#allocation2 + $0x30] sm:$0xff]
    %v383 = vld [vmem:[#allocation2 + $0x38] sm:$0xff]
    %v384 = vld [vmem:[#allocation2 + $0x40] sm:$0xff]
    %v385 = vld [vmem:[#allocation2 + $0x48] sm:$0xff]
    %v386 = vld [vmem:[#allocation2 + $0x50] sm:$0xff]
    %v387 = vld [vmem:[#allocation2 + $0x58] sm:$0xff]
    %v388 = vld [vmem:[#allocation2 + $0x60] sm:$0xff]
    %v389 = vld [vmem:[#allocation2 + $0x68] sm:$0xff]
    %v390 = vld [vmem:[#allocation2 + $0x70] sm:$0xff]
    %v391 = vld [vmem:[#allocation2 + $0x78] sm:$0xff]
    %v392 = vld [vmem:[#allocation2 + $0x80] sm:$0xff]
    %v393 = vld [vmem:[#allocation2 + $0x88] sm:$0xff]
    %v394 = vld [vmem:[#allocation2 + $0x90] sm:$0xff]
    %v395 = vld [vmem:[#allocation2 + $0x98] sm:$0xff]
    %v396 = vld [vmem:[#allocation2 + $0xa0] sm:$0xff]
    %v397 = vld [vmem:[#allocation2 + $0xa8] sm:$0xff]
    %v398 = vld [vmem:[#allocation2 + $0xb0] sm:$0xff]
    %v399 = vld [vmem:[#allocation2 + $0xb8] sm:$0xff]
    %v400 = vld [vmem:[#allocation2 + $0xc0] sm:$0xf]
    %v401 = vld [vmem:[#allocation2 + $0xc8] sm:$0xf]
    %v402 = vld [vmem:[#allocation2 + $0xd0] sm:$0xf]
    %v403 = vld [vmem:[#allocation2 + $0xd8] sm:$0xf]
    %v404 = vld [vmem:[#allocation2 + $0xe0] sm:$0xf]
    %v405 = vld [vmem:[#allocation2 + $0xe8] sm:$0xf]
    %v406 = vpack.c.bf16 %v382, %v376
    %v407 = vpack.c.bf16 %v383, %v377
    %v408 = vpack.c.bf16 %v384, %v378
    %v409 = vpack.c.bf16 %v385, %v379
    %v410 = vpack.c.bf16 %v386, %v380
    %v411 = vpack.c.bf16 %v387, %v381
    %v412 = vpack.c.bf16 %v394, %v388
    %v413 = vpack.c.bf16 %v395, %v389
    %v414 = vpack.c.bf16 %v396, %v390
    %v415 = vpack.c.bf16 %v397, %v391
    %v416 = vpack.c.bf16 %v398, %v392
    %v417 = vpack.c.bf16 %v399, %v393
    %v418 = vpack.c.bf16 %v400, %v400
    %v419 = vpack.c.bf16 %v401, %v401
    %v420 = vpack.c.bf16 %v402, %v402
    %v421 = vpack.c.bf16 %v403, %v403
    %v422 = vpack.c.bf16 %v404, %v404
    %v423 = vpack.c.bf16 %v405, %v405
    %vm424 = vcmask 293888
    %v426 = vsel %vm424, %v375, 0
    %vm428 = vcmask 1041408
    %v430 = vsel %vm428, %v418, 0
    %v433 = vsel %vm428, %v419, 0
    %v436 = vsel %vm428, %v420, 0
    %v439 = vsel %vm428, %v421, 0
    %v442 = vsel %vm428, %v422, 0
    %v445 = vsel %vm428, %v423, 0
    %447 = vmatprep.subr.bf16.mxu0 %v407
    %448 = vmatpush1.bf16.msra.mxu0 %v406
    %449 = vmatprep.subr.bf16.mxu0 %v413
    %450 = vmatpush1.bf16.msra.mxu0 %v412
    %451 = vmatprep.subr.bf16.mxu0 %v433
    %452 = vmatpush1.bf16.msra.mxu0 %v430
    %453 = vmatprep.subr.bf16.mxu0 0
    %454 = vmatpush1.bf16.msra.mxu0 0
    %455 = vmatprep.subr.bf16.mxu0 0
    %456 = vmatpush1.bf16.msra.mxu0 0
    %457 = vmatprep.subr.bf16.mxu0 0
    %458 = vmatpush1.bf16.msra.mxu0 0
    %459 = vmatprep.subr.bf16.mxu0 0
    %460 = vmatpush1.bf16.msra.mxu0 0
    %461 = vmatprep.subr.bf16.mxu0 0
    %462 = vmatpush1.bf16.msra.mxu0 0
    %463 = vmatprep.subr.bf16.mxu0 0
    %464 = vmatpush1.bf16.msra.mxu0 0
    %465 = vmatprep.subr.bf16.mxu0 0
    %466 = vmatpush1.bf16.msra.mxu0 0
    %467 = vmatprep.subr.bf16.mxu0 0
    %468 = vmatpush1.bf16.msra.mxu0 0
    %469 = vmatprep.subr.bf16.mxu0 0
    %470 = vmatpush1.bf16.msra.mxu0 0
    %471 = vmatprep.subr.bf16.mxu0 0
    %472 = vmatpush1.bf16.msra.mxu0 0
    %473 = vmatprep.subr.bf16.mxu0 0
    %474 = vmatpush1.bf16.msra.mxu0 0
    %475 = vmatprep.subr.bf16.mxu0 0
    %476 = vmatpush1.bf16.msra.mxu0 0
    %477 = vmatprep.subr.bf16.mxu0 0
    %478 = vmatpush1.bf16.msra.mxu0 0
    %479 = vmatprep.mubr.bf16.mxu0 0
    %480 = vmatmul.mubr.bf16.gmra.mrb[0].mxu0 %v426
    %v481 = vpop.f32.mrb[0].mxu0
    %v482 = vadd.f32 0.0, %v481
    %v483 = vpop.f32.mrb[0].mxu0
    %v484 = vadd.f32 0.0, %v483
    %v485 = vpop.f32.mrb[0].mxu0
    %v486 = vpop.f32.mrb[0].mxu0
    %487 = vdwg.mxu0
    %488 = vmatprep.subr.bf16.mxu0 %v409
    %489 = vmatpush1.bf16.msra.mxu0 %v408
    %490 = vmatprep.subr.bf16.mxu0 %v415
    %491 = vmatpush1.bf16.msra.mxu0 %v414
    %492 = vmatprep.subr.bf16.mxu0 %v439
    %493 = vmatpush1.bf16.msra.mxu0 %v436
    %494 = vmatprep.subr.bf16.mxu0 0
    %495 = vmatpush1.bf16.msra.mxu0 0
    %496 = vmatprep.subr.bf16.mxu0 0
    %497 = vmatpush1.bf16.msra.mxu0 0
    %498 = vmatprep.subr.bf16.mxu0 0
    %499 = vmatpush1.bf16.msra.mxu0 0
    %500 = vmatprep.subr.bf16.mxu0 0
    %501 = vmatpush1.bf16.msra.mxu0 0
    %502 = vmatprep.subr.bf16.mxu0 0
    %503 = vmatpush1.bf16.msra.mxu0 0
    %504 = vmatprep.subr.bf16.mxu0 0
    %505 = vmatpush1.bf16.msra.mxu0 0
    %506 = vmatprep.subr.bf16.mxu0 0
    %507 = vmatpush1.bf16.msra.mxu0 0
    %508 = vmatprep.subr.bf16.mxu0 0
    %509 = vmatpush1.bf16.msra.mxu0 0
    %510 = vmatprep.subr.bf16.mxu0 0
    %511 = vmatpush1.bf16.msra.mxu0 0
    %512 = vmatprep.subr.bf16.mxu0 0
    %513 = vmatpush1.bf16.msra.mxu0 0
    %514 = vmatprep.subr.bf16.mxu0 0
    %515 = vmatpush1.bf16.msra.mxu0 0
    %516 = vmatprep.subr.bf16.mxu0 0
    %517 = vmatpush1.bf16.msra.mxu0 0
    %518 = vmatprep.subr.bf16.mxu0 0
    %519 = vmatpush1.bf16.msra.mxu0 0
    %520 = vmatprep.mubr.bf16.mxu0 0
    %521 = vmatmul.mubr.bf16.gmra.mrb[0].mxu0 %v426
    %v522 = vpop.f32.mrb[0].mxu0
    %v523 = vadd.f32 0.0, %v522
    %v524 = vpop.f32.mrb[0].mxu0
    %v525 = vadd.f32 0.0, %v524
    %v526 = vpop.f32.mrb[0].mxu0
    %v527 = vpop.f32.mrb[0].mxu0
    %528 = vdwg.mxu0
    %529 = vmatprep.subr.bf16.mxu0 %v411
    %530 = vmatpush1.bf16.msra.mxu0 %v410
    %531 = vmatprep.subr.bf16.mxu0 %v417
    %532 = vmatpush1.bf16.msra.mxu0 %v416
    %533 = vmatprep.subr.bf16.mxu0 %v445
    %534 = vmatpush1.bf16.msra.mxu0 %v442
    %535 = vmatprep.subr.bf16.mxu0 0
    %536 = vmatpush1.bf16.msra.mxu0 0
    %537 = vmatprep.subr.bf16.mxu0 0
    %538 = vmatpush1.bf16.msra.mxu0 0
    %539 = vmatprep.subr.bf16.mxu0 0
    %540 = vmatpush1.bf16.msra.mxu0 0
    %541 = vmatprep.subr.bf16.mxu0 0
    %542 = vmatpush1.bf16.msra.mxu0 0
    %543 = vmatprep.subr.bf16.mxu0 0
    %544 = vmatpush1.bf16.msra.mxu0 0
    %545 = vmatprep.subr.bf16.mxu0 0
    %546 = vmatpush1.bf16.msra.mxu0 0
    %547 = vmatprep.subr.bf16.mxu0 0
    %548 = vmatpush1.bf16.msra.mxu0 0
    %549 = vmatprep.subr.bf16.mxu0 0
    %550 = vmatpush1.bf16.msra.mxu0 0
    %551 = vmatprep.subr.bf16.mxu0 0
    %552 = vmatpush1.bf16.msra.mxu0 0
    %553 = vmatprep.subr.bf16.mxu0 0
    %554 = vmatpush1.bf16.msra.mxu0 0
    %555 = vmatprep.subr.bf16.mxu0 0
    %556 = vmatpush1.bf16.msra.mxu0 0
    %557 = vmatprep.subr.bf16.mxu0 0
    %558 = vmatpush1.bf16.msra.mxu0 0
    %559 = vmatprep.subr.bf16.mxu0 0
    %560 = vmatpush1.bf16.msra.mxu0 0
    %561 = vmatprep.mubr.bf16.mxu0 0
    %562 = vmatmul.mubr.bf16.gmra.mrb[0].mxu0 %v426
    %v563 = vpop.f32.mrb[0].mxu0
    %v564 = vadd.f32 0.0, %v563
    %v565 = vpop.f32.mrb[0].mxu0
    %v566 = vadd.f32 0.0, %v565
    %v567 = vpop.f32.mrb[0].mxu0
    %v568 = vpop.f32.mrb[0].mxu0
    %569 = vdwg.mxu0
    %v570 = vld [vmem:[%s2] sm:$0xf]
    %572 = vset.pattern.permute.xlu0 0
    %573 = vperm.xlu0 %572, %v570
    %v574 = vpop.permute.xlu0 %573
    %v576 = vmul.f32 %v482, %v574
    %v577 = vmul.f32 %v484, %v574
    %v578 = vmul.f32 %v523, %v574
    %v579 = vmul.f32 %v525, %v574
    %v580 = vmul.f32 %v564, %v574
    %v581 = vmul.f32 %v566, %v574
    %v582 = vld [vmem:[%s2 + $0x4] sm:$0xf]
    %584 = vset.pattern.permute.xlu0 0
    %585 = vperm.xlu0 %584, %v582
    %v586 = vpop.permute.xlu0 %585
    %v588 = vadd.f32 %v576, %v586
    %v589 = vadd.f32 %v577, %v586
    %v590 = vadd.f32 %v578, %v586
    %v591 = vadd.f32 %v579, %v586
    %v592 = vadd.f32 %v580, %v586
    %v593 = vadd.f32 %v581, %v586
    %v594 = vmax.f32 %v588, 0.0
    %v595 = vmax.f32 %v589, 0.0
    %v596 = vmax.f32 %v590, 0.0
    %v597 = vmax.f32 %v591, 0.0
    %v598 = vmax.f32 %v592, 0.0
    %v599 = vmax.f32 %v593, 0.0
    %v600 = vsel %vm42, 1, 0
    %v601 = vlaneseq
    %v602 = vshrl.u32 %v601, 7
    %v603 = vsub.s32 0, %v602
    %v604 = vrot.slane %v600, %v603
    %v605 = vlaneseq
    %v606 = vshrl.u32 %v605, 7
    %v607 = vsub.s32 1, %v606
    %v608 = vrot.slane %v600, %v607
    %v609 = vlaneseq
    %v610 = vshrl.u32 %v609, 7
    %v611 = vsub.s32 2, %v610
    %v612 = vrot.slane %v600, %v611
    %v613 = vlaneseq
    %v614 = vshrl.u32 %v613, 7
    %v615 = vsub.s32 3, %v614
    %v616 = vrot.slane %v600, %v615
    %v617 = vlaneseq
    %v618 = vshrl.u32 %v617, 7
    %v619 = vsub.s32 4, %v618
    %v620 = vrot.slane %v600, %v619
    %v621 = vlaneseq
    %v622 = vshrl.u32 %v621, 7
    %v623 = vsub.s32 5, %v622
    %v624 = vrot.slane %v600, %v623
    %vm625 = vcmp.eq.s32.totalorder %v604, 1
    %vm626 = vcmp.eq.s32.totalorder %v608, 1
    %vm627 = vcmp.eq.s32.totalorder %v612, 1
    %vm628 = vcmp.eq.s32.totalorder %v616, 1
    %vm629 = vcmp.eq.s32.totalorder %v620, 1
    %vm630 = vcmp.eq.s32.totalorder %v624, 1
    %v631 = vsel %vm625, %v594, 0.0
    %v632 = vsel %vm626, %v595, 0.0
    %v633 = vsel %vm627, %v596, 0.0
    %v634 = vsel %vm628, %v597, 0.0
    %v635 = vsel %vm629, %v598, 0.0
    %v636 = vsel %vm630, %v599, 0.0
    %v643 = vcombine.low %v631, %v632
    %v644 = vcombine.low %v633, %v634
    %v645 = vcombine.low %v635, %v636
    %646 = vrot.lane.b32.xlu0 %v643, 19
    %v647 = vpop.permute.xlu0 %646
    %648 = vrot.lane.b32.xlu0 %v644, 19
    %v649 = vpop.permute.xlu0 %648
    %650 = vrot.lane.b32.xlu0 %v645, 19
    %v651 = vpop.permute.xlu0 %650
    %v652 = vrot.slane %v647, 4
    %v653 = vrot.slane %v649, 4
    %v654 = vrot.slane %v651, 4
    %vm655 = vcmask 154624
    %v656 = vsel %vm655, %v652, %v647
    %vm657 = vcmask 1043456
    %v658 = vsel %vm657, %v652, %v653
    %v659 = vsel %vm655, %v658, %v649
    %v660 = vsel %vm657, %v653, %v654
    %v661 = vsel %vm655, %v660, %v651
    %vm665 = vcmask 1043608
    %vm666 = vcmask 1047556
    %vm667 = vmor %vm666, %vm665
    %668 = vst.msk [vmem:[#allocation3] sm:$0xff] %vm667, %v656
    %669 = vst [vmem:[#allocation3 + $0x8] sm:$0xff] %v659
    %vm670 = vcmask 531460
    %vm671 = vmor %vm670, %vm657
    %672 = vst.msk [vmem:[#allocation3 + $0x10] sm:$0xff] %vm671, %v661
    %v673 = vld [vmem:[%s3] sm:$0xf]
    %v674 = vld [vmem:[#allocation3] sm:$0xff]
    %v675 = vld [vmem:[#allocation3 + $0x8] sm:$0xff]
    %v676 = vld [vmem:[#allocation3 + $0x10] sm:$0xff]
    %678 = vset.pattern.permute.xlu0 0
    %679 = vperm.xlu0 %678, %v673
    %v680 = vpop.permute.xlu0 %679
    %v685 = vcombine.high %v674, %v674
    %v686 = vcombine.high %v675, %v675
    %v687 = vcombine.high %v676, %v676
    %v691 = vmul.f32 %v680, %v674
    %v692 = vmul.f32 %v680, %v685
    %v693 = vmul.f32 %v680, %v675
    %v694 = vmul.f32 %v680, %v686
    %v695 = vmul.f32 %v680, %v676
    %v696 = vmul.f32 %v680, %v687
    %v697 = vadd.f32 %v691, 0.0
    %v698 = vadd.f32 %v692, 0.0
    %v699 = vadd.f32 %v693, 0.0
    %v700 = vadd.f32 %v694, 0.0
    %v701 = vadd.f32 %v695, 0.0
    %v702 = vadd.f32 %v696, 0.0
    %v703 = vld [vmem:[%s3] sm:$0xf]
    %v704 = vld [vmem:[#allocation3] sm:$0xff]
    %v705 = vld [vmem:[#allocation3 + $0x8] sm:$0xff]
    %v706 = vld [vmem:[#allocation3 + $0x10] sm:$0xff]
    %708 = vset.pattern.permute.xlu0 1
    %709 = vperm.xlu0 %708, %v703
    %v710 = vpop.permute.xlu0 %709
    %v715 = vcombine.high %v704, %v704
    %v716 = vcombine.high %v705, %v705
    %v717 = vcombine.high %v706, %v706
    %718 = vrot.lane.b32.xlu0 %v704, 127
    %v719 = vpop.permute.xlu0 %718
    %720 = vrot.lane.b32.xlu0 %v715, 127
    %v721 = vpop.permute.xlu0 %720
    %722 = vrot.lane.b32.xlu0 %v705, 127
    %v723 = vpop.permute.xlu0 %722
    %724 = vrot.lane.b32.xlu0 %v716, 127
    %v725 = vpop.permute.xlu0 %724
    %726 = vrot.lane.b32.xlu0 %v706, 127
    %v727 = vpop.permute.xlu0 %726
    %728 = vrot.lane.b32.xlu0 %v717, 127
    %v729 = vpop.permute.xlu0 %728
    %v730 = vsel %vm83, %v719, %v721
    %v731 = vsel %vm83, %v721, %v723
    %v732 = vsel %vm83, %v723, %v725
    %v733 = vsel %vm83, %v725, %v727
    %v734 = vsel %vm83, %v727, %v729
    %v741 = vmul.f32 %v710, %v730
    %v742 = vmul.f32 %v710, %v731
    %v743 = vmul.f32 %v710, %v732
    %v744 = vmul.f32 %v710, %v733
    %v745 = vmul.f32 %v710, %v734
    %v746 = vmul.f32 %v710, %v729
    %v747 = vadd.f32 %v697, %v741
    %v748 = vadd.f32 %v698, %v742
    %v749 = vadd.f32 %v699, %v743
    %v750 = vadd.f32 %v700, %v744
    %v751 = vadd.f32 %v701, %v745
    %v752 = vadd.f32 %v702, %v746
    %v753 = vld [vmem:[%s3] sm:$0xf]
    %v754 = vld [vmem:[#allocation3] sm:$0xff]
    %v755 = vld [vmem:[#allocation3 + $0x8] sm:$0xff]
    %v756 = vld [vmem:[#allocation3 + $0x10] sm:$0xff]
    %758 = vset.pattern.permute.xlu0 2
    %759 = vperm.xlu0 %758, %v753
    %v760 = vpop.permute.xlu0 %759
    %v765 = vcombine.high %v754, %v754
    %v766 = vcombine.high %v755, %v755
    %v767 = vcombine.high %v756, %v756
    %768 = vrot.lane.b32.xlu0 %v754, 126
    %v769 = vpop.permute.xlu0 %768
    %770 = vrot.lane.b32.xlu0 %v765, 126
    %v771 = vpop.permute.xlu0 %770
    %772 = vrot.lane.b32.xlu0 %v755, 126
    %v773 = vpop.permute.xlu0 %772
    %774 = vrot.lane.b32.xlu0 %v766, 126
    %v775 = vpop.permute.xlu0 %774
    %776 = vrot.lane.b32.xlu0 %v756, 126
    %v777 = vpop.permute.xlu0 %776
    %778 = vrot.lane.b32.xlu0 %v767, 126
    %v779 = vpop.permute.xlu0 %778
    %v780 = vsel %vm123, %v769, %v771
    %v781 = vsel %vm123, %v771, %v773
    %v782 = vsel %vm123, %v773, %v775
    %v783 = vsel %vm123, %v775, %v777
    %v784 = vsel %vm123, %v777, %v779
    %v791 = vmul.f32 %v760, %v780
    %v792 = vmul.f32 %v760, %v781
    %v793 = vmul.f32 %v760, %v782
    %v794 = vmul.f32 %v760, %v783
    %v795 = vmul.f32 %v760, %v784
    %v796 = vmul.f32 %v760, %v779
    %v797 = vadd.f32 %v747, %v791
    %v798 = vadd.f32 %v748, %v792
    %v799 = vadd.f32 %v749, %v793
    %v800 = vadd.f32 %v750, %v794
    %v801 = vadd.f32 %v751, %v795
    %v802 = vadd.f32 %v752, %v796
    %v803 = vld [vmem:[%s3] sm:$0xf]
    %v804 = vld [vmem:[#allocation3] sm:$0xff]
    %v805 = vld [vmem:[#allocation3 + $0x8] sm:$0xff]
    %v806 = vld [vmem:[#allocation3 + $0x10] sm:$0xff]
    %808 = vset.pattern.permute.xlu0 3
    %809 = vperm.xlu0 %808, %v803
    %v810 = vpop.permute.xlu0 %809
    %v815 = vcombine.high %v804, %v804
    %v816 = vcombine.high %v805, %v805
    %v817 = vcombine.high %v806, %v806
    %818 = vrot.lane.b32.xlu0 %v804, 110
    %v819 = vpop.permute.xlu0 %818
    %820 = vrot.lane.b32.xlu0 %v815, 110
    %v821 = vpop.permute.xlu0 %820
    %822 = vrot.lane.b32.xlu0 %v805, 110
    %v823 = vpop.permute.xlu0 %822
    %824 = vrot.lane.b32.xlu0 %v816, 110
    %v825 = vpop.permute.xlu0 %824
    %826 = vrot.lane.b32.xlu0 %v806, 110
    %v827 = vpop.permute.xlu0 %826
    %828 = vrot.lane.b32.xlu0 %v817, 110
    %v829 = vpop.permute.xlu0 %828
    %v830 = vsel %vm162, %v819, %v821
    %v831 = vsel %vm162, %v821, %v823
    %v832 = vsel %vm162, %v823, %v825
    %v833 = vsel %vm162, %v825, %v827
    %v834 = vsel %vm162, %v827, %v829
    %v841 = vmul.f32 %v810, %v830
    %v842 = vmul.f32 %v810, %v831
    %v843 = vmul.f32 %v810, %v832
    %v844 = vmul.f32 %v810, %v833
    %v845 = vmul.f32 %v810, %v834
    %v846 = vmul.f32 %v810, %v829
    %v847 = vadd.f32 %v797, %v841
    %v848 = vadd.f32 %v798, %v842
    %v849 = vadd.f32 %v799, %v843
    %v850 = vadd.f32 %v800, %v844
    %v851 = vadd.f32 %v801, %v845
    %v852 = vadd.f32 %v802, %v846
    %v853 = vld [vmem:[%s3] sm:$0xf]
    %v854 = vld [vmem:[#allocation3] sm:$0xff]
    %v855 = vld [vmem:[#allocation3 + $0x8] sm:$0xff]
    %v856 = vld [vmem:[#allocation3 + $0x10] sm:$0xff]
    %858 = vset.pattern.permute.xlu0 4
    %859 = vperm.xlu0 %858, %v853
    %v860 = vpop.permute.xlu0 %859
    %v865 = vcombine.high %v854, %v854
    %v866 = vcombine.high %v855, %v855
    %v867 = vcombine.high %v856, %v856
    %868 = vrot.lane.b32.xlu0 %v854, 109
    %v869 = vpop.permute.xlu0 %868
    %870 = vrot.lane.b32.xlu0 %v865, 109
    %v871 = vpop.permute.xlu0 %870
    %872 = vrot.lane.b32.xlu0 %v855, 109
    %v873 = vpop.permute.xlu0 %872
    %874 = vrot.lane.b32.xlu0 %v866, 109
    %v875 = vpop.permute.xlu0 %874
    %876 = vrot.lane.b32.xlu0 %v856, 109
    %v877 = vpop.permute.xlu0 %876
    %878 = vrot.lane.b32.xlu0 %v867, 109
    %v879 = vpop.permute.xlu0 %878
    %v880 = vsel %vm201, %v869, %v871
    %v881 = vsel %vm201, %v871, %v873
    %v882 = vsel %vm201, %v873, %v875
    %v883 = vsel %vm201, %v875, %v877
    %v884 = vsel %vm201, %v877, %v879
    %v891 = vmul.f32 %v860, %v880
    %v892 = vmul.f32 %v860, %v881
    %v893 = vmul.f32 %v860, %v882
    %v894 = vmul.f32 %v860, %v883
    %v895 = vmul.f32 %v860, %v884
    %v896 = vmul.f32 %v860, %v879
    %v897 = vadd.f32 %v847, %v891
    %v898 = vadd.f32 %v848, %v892
    %v899 = vadd.f32 %v849, %v893
    %v900 = vadd.f32 %v850, %v894
    %v901 = vadd.f32 %v851, %v895
    %v902 = vadd.f32 %v852, %v896
    %v903 = vld [vmem:[%s3] sm:$0xf]
    %v904 = vld [vmem:[#allocation3] sm:$0xff]
    %v905 = vld [vmem:[#allocation3 + $0x8] sm:$0xff]
    %v906 = vld [vmem:[#allocation3 + $0x10] sm:$0xff]
    %908 = vset.pattern.permute.xlu0 5
    %909 = vperm.xlu0 %908, %v903
    %v910 = vpop.permute.xlu0 %909
    %v915 = vcombine.high %v904, %v904
    %v916 = vcombine.high %v905, %v905
    %v917 = vcombine.high %v906, %v906
    %918 = vrot.lane.b32.xlu0 %v904, 108
    %v919 = vpop.permute.xlu0 %918
    %920 = vrot.lane.b32.xlu0 %v915, 108
    %v921 = vpop.permute.xlu0 %920
    %922 = vrot.lane.b32.xlu0 %v905, 108
    %v923 = vpop.permute.xlu0 %922
    %924 = vrot.lane.b32.xlu0 %v916, 108
    %v925 = vpop.permute.xlu0 %924
    %926 = vrot.lane.b32.xlu0 %v906, 108
    %v927 = vpop.permute.xlu0 %926
    %928 = vrot.lane.b32.xlu0 %v917, 108
    %v929 = vpop.permute.xlu0 %928
    %v930 = vsel %vm240, %v919, %v921
    %v931 = vsel %vm240, %v921, %v923
    %v932 = vsel %vm240, %v923, %v925
    %v933 = vsel %vm240, %v925, %v927
    %v934 = vsel %vm240, %v927, %v929
    %v941 = vmul.f32 %v910, %v930
    %v942 = vmul.f32 %v910, %v931
    %v943 = vmul.f32 %v910, %v932
    %v944 = vmul.f32 %v910, %v933
    %v945 = vmul.f32 %v910, %v934
    %v946 = vmul.f32 %v910, %v929
    %v947 = vadd.f32 %v897, %v941
    %v948 = vadd.f32 %v898, %v942
    %v949 = vadd.f32 %v899, %v943
    %v950 = vadd.f32 %v900, %v944
    %v951 = vadd.f32 %v901, %v945
    %v952 = vadd.f32 %v902, %v946
    %v953 = vld [vmem:[%s3] sm:$0xf]
    %v954 = vld [vmem:[#allocation3] sm:$0xff]
    %v955 = vld [vmem:[#allocation3 + $0x8] sm:$0xff]
    %v956 = vld [vmem:[#allocation3 + $0x10] sm:$0xff]
    %958 = vset.pattern.permute.xlu0 6
    %959 = vperm.xlu0 %958, %v953
    %v960 = vpop.permute.xlu0 %959
    %v965 = vcombine.high %v954, %v954
    %v966 = vcombine.high %v955, %v955
    %v967 = vcombine.high %v956, %v956
    %968 = vrot.lane.b32.xlu0 %v954, 92
    %v969 = vpop.permute.xlu0 %968
    %970 = vrot.lane.b32.xlu0 %v965, 92
    %v971 = vpop.permute.xlu0 %970
    %972 = vrot.lane.b32.xlu0 %v955, 92
    %v973 = vpop.permute.xlu0 %972
    %974 = vrot.lane.b32.xlu0 %v966, 92
    %v975 = vpop.permute.xlu0 %974
    %976 = vrot.lane.b32.xlu0 %v956, 92
    %v977 = vpop.permute.xlu0 %976
    %978 = vrot.lane.b32.xlu0 %v967, 92
    %v979 = vpop.permute.xlu0 %978
    %v980 = vsel %vm279, %v969, %v971
    %v981 = vsel %vm279, %v971, %v973
    %v982 = vsel %vm279, %v973, %v975
    %v983 = vsel %vm279, %v975, %v977
    %v984 = vsel %vm279, %v977, %v979
    %v991 = vmul.f32 %v960, %v980
    %v992 = vmul.f32 %v960, %v981
    %v993 = vmul.f32 %v960, %v982
    %v994 = vmul.f32 %v960, %v983
    %v995 = vmul.f32 %v960, %v984
    %v996 = vmul.f32 %v960, %v979
    %v997 = vadd.f32 %v947, %v991
    %v998 = vadd.f32 %v948, %v992
    %v999 = vadd.f32 %v949, %v993
    %v1000 = vadd.f32 %v950, %v994
    %v1001 = vadd.f32 %v951, %v995
    %v1002 = vadd.f32 %v952, %v996
    %v1003 = vld [vmem:[%s3] sm:$0xf]
    %v1004 = vld [vmem:[#allocation3] sm:$0xff]
    %v1005 = vld [vmem:[#allocation3 + $0x8] sm:$0xff]
    %v1006 = vld [vmem:[#allocation3 + $0x10] sm:$0xff]
    %1008 = vset.pattern.permute.xlu0 7
    %1009 = vperm.xlu0 %1008, %v1003
    %v1010 = vpop.permute.xlu0 %1009
    %v1015 = vcombine.high %v1004, %v1004
    %v1016 = vcombine.high %v1005, %v1005
    %v1017 = vcombine.high %v1006, %v1006
    %1018 = vrot.lane.b32.xlu0 %v1004, 91
    %v1019 = vpop.permute.xlu0 %1018
    %1020 = vrot.lane.b32.xlu0 %v1015, 91
    %v1021 = vpop.permute.xlu0 %1020
    %1022 = vrot.lane.b32.xlu0 %v1005, 91
    %v1023 = vpop.permute.xlu0 %1022
    %1024 = vrot.lane.b32.xlu0 %v1016, 91
    %v1025 = vpop.permute.xlu0 %1024
    %1026 = vrot.lane.b32.xlu0 %v1006, 91
    %v1027 = vpop.permute.xlu0 %1026
    %1028 = vrot.lane.b32.xlu0 %v1017, 91
    %v1029 = vpop.permute.xlu0 %1028
    %v1030 = vsel %vm318, %v1019, %v1021
    %v1031 = vsel %vm318, %v1021, %v1023
    %v1032 = vsel %vm318, %v1023, %v1025
    %v1033 = vsel %vm318, %v1025, %v1027
    %v1034 = vsel %vm318, %v1027, %v1029
    %v1041 = vmul.f32 %v1010, %v1030
    %v1042 = vmul.f32 %v1010, %v1031
    %v1043 = vmul.f32 %v1010, %v1032
    %v1044 = vmul.f32 %v1010, %v1033
    %v1045 = vmul.f32 %v1010, %v1034
    %v1046 = vmul.f32 %v1010, %v1029
    %v1047 = vadd.f32 %v997, %v1041
    %v1048 = vadd.f32 %v998, %v1042
    %v1049 = vadd.f32 %v999, %v1043
    %v1050 = vadd.f32 %v1000, %v1044
    %v1051 = vadd.f32 %v1001, %v1045
    %v1052 = vadd.f32 %v1002, %v1046
    %v1053 = vld [vmem:[%s3] sm:$0xf]
    %v1054 = vld [vmem:[#allocation3] sm:$0xff]
    %v1055 = vld [vmem:[#allocation3 + $0x8] sm:$0xff]
    %v1056 = vld [vmem:[#allocation3 + $0x10] sm:$0xff]
    %1058 = vset.pattern.permute.xlu0 8
    %1059 = vperm.xlu0 %1058, %v1053
    %v1060 = vpop.permute.xlu0 %1059
    %v1065 = vcombine.high %v1054, %v1054
    %v1066 = vcombine.high %v1055, %v1055
    %v1067 = vcombine.high %v1056, %v1056
    %1068 = vrot.lane.b32.xlu0 %v1054, 90
    %v1069 = vpop.permute.xlu0 %1068
    %1070 = vrot.lane.b32.xlu0 %v1065, 90
    %v1071 = vpop.permute.xlu0 %1070
    %1072 = vrot.lane.b32.xlu0 %v1055, 90
    %v1073 = vpop.permute.xlu0 %1072
    %1074 = vrot.lane.b32.xlu0 %v1066, 90
    %v1075 = vpop.permute.xlu0 %1074
    %1076 = vrot.lane.b32.xlu0 %v1056, 90
    %v1077 = vpop.permute.xlu0 %1076
    %1078 = vrot.lane.b32.xlu0 %v1067, 90
    %v1079 = vpop.permute.xlu0 %1078
    %v1080 = vsel %vm357, %v1069, %v1071
    %v1081 = vsel %vm357, %v1071, %v1073
    %v1082 = vsel %vm357, %v1073, %v1075
    %v1083 = vsel %vm357, %v1075, %v1077
    %v1084 = vsel %vm357, %v1077, %v1079
    %v1091 = vmul.f32 %v1060, %v1080
    %v1092 = vmul.f32 %v1060, %v1081
    %v1093 = vmul.f32 %v1060, %v1082
    %v1094 = vmul.f32 %v1060, %v1083
    %v1095 = vmul.f32 %v1060, %v1084
    %v1096 = vmul.f32 %v1060, %v1079
    %v1097 = vadd.f32 %v1047, %v1091
    %v1098 = vadd.f32 %v1048, %v1092
    %v1099 = vadd.f32 %v1049, %v1093
    %v1100 = vadd.f32 %v1050, %v1094
    %v1101 = vadd.f32 %v1051, %v1095
    %v1102 = vadd.f32 %v1052, %v1096
    %v1103 = vld [vmem:[%s4] sm:$0xf]
    %1105 = vset.pattern.permute.xlu0 0
    %1106 = vperm.xlu0 %1105, %v1103
    %v1107 = vpop.permute.xlu0 %1106
    %v1109 = vmul.f32 %v1097, %v1107
    %v1110 = vmul.f32 %v1098, %v1107
    %v1111 = vmul.f32 %v1099, %v1107
    %v1112 = vmul.f32 %v1100, %v1107
    %v1113 = vmul.f32 %v1101, %v1107
    %v1114 = vmul.f32 %v1102, %v1107
    %v1115 = vld [vmem:[%s4 + $0x4] sm:$0xf]
    %1117 = vset.pattern.permute.xlu0 0
    %1118 = vperm.xlu0 %1117, %v1115
    %v1119 = vpop.permute.xlu0 %1118
    %v1121 = vadd.f32 %v1109, %v1119
    %v1122 = vadd.f32 %v1110, %v1119
    %v1123 = vadd.f32 %v1111, %v1119
    %v1124 = vadd.f32 %v1112, %v1119
    %v1125 = vadd.f32 %v1113, %v1119
    %v1126 = vadd.f32 %v1114, %v1119
    %v1127 = vmax.f32 %v1121, 0.0
    %v1128 = vmax.f32 %v1122, 0.0
    %v1129 = vmax.f32 %v1123, 0.0
    %v1130 = vmax.f32 %v1124, 0.0
    %v1131 = vmax.f32 %v1125, 0.0
    %v1132 = vmax.f32 %v1126, 0.0
    %v1133 = vsel %vm625, %v1127, 0.0
    %v1134 = vsel %vm626, %v1128, 0.0
    %v1135 = vsel %vm627, %v1129, 0.0
    %v1136 = vsel %vm628, %v1130, 0.0
    %v1137 = vsel %vm629, %v1131, 0.0
    %v1138 = vsel %vm630, %v1132, 0.0
    %1139 = vrot.lane.b32.xlu0 %v631, 19
    %v1140 = vpop.permute.xlu0 %1139
    %1141 = vrot.lane.b32.xlu0 %v632, 19
    %v1142 = vpop.permute.xlu0 %1141
    %1143 = vrot.lane.b32.xlu0 %v633, 19
    %v1144 = vpop.permute.xlu0 %1143
    %1145 = vrot.lane.b32.xlu0 %v634, 19
    %v1146 = vpop.permute.xlu0 %1145
    %1147 = vrot.lane.b32.xlu0 %v635, 19
    %v1148 = vpop.permute.xlu0 %1147
    %1149 = vrot.lane.b32.xlu0 %v636, 19
    %v1150 = vpop.permute.xlu0 %1149
    %v1151 = vsel %vm655, %v1140, %v1142
    %v1152 = vsel %vm655, %v1142, %v1144
    %v1153 = vsel %vm655, %v1144, %v1146
    %v1154 = vsel %vm655, %v1146, %v1148
    %v1155 = vsel %vm655, %v1148, %v1150
    %1162 = vst.msk [vmem:[#allocation7] sm:$0xf] %vm665, %v1140
    %1163 = vst [vmem:[#allocation7 + $0x8] sm:$0xf] %v1151
    %1164 = vst [vmem:[#allocation7 + $0x10] sm:$0xf] %v1152
    %1165 = vst [vmem:[#allocation7 + $0x18] sm:$0xf] %v1153
    %1166 = vst [vmem:[#allocation7 + $0x20] sm:$0xf] %v1154
    %vm1167 = vcmask 527360
    %1168 = vst.msk [vmem:[#allocation7 + $0x28] sm:$0xf] %vm1167, %v1155
    %v1175 = vrot.slane %v1133, 4
    %v1176 = vrot.slane %v1134, 4
    %v1177 = vrot.slane %v1135, 4
    %v1178 = vrot.slane %v1136, 4
    %v1179 = vrot.slane %v1137, 4
    %v1180 = vrot.slane %v1138, 4
    %1181 = vrot.lane.b32.xlu0 %v1175, 19
    %v1182 = vpop.permute.xlu0 %1181
    %1183 = vrot.lane.b32.xlu0 %v1176, 19
    %v1184 = vpop.permute.xlu0 %1183
    %1185 = vrot.lane.b32.xlu0 %v1177, 19
    %v1186 = vpop.permute.xlu0 %1185
    %1187 = vrot.lane.b32.xlu0 %v1178, 19
    %v1188 = vpop.permute.xlu0 %1187
    %1189 = vrot.lane.b32.xlu0 %v1179, 19
    %v1190 = vpop.permute.xlu0 %1189
    %1191 = vrot.lane.b32.xlu0 %v1180, 19
    %v1192 = vpop.permute.xlu0 %1191
    %v1193 = vsel %vm655, %v1182, %v1184
    %v1194 = vsel %vm655, %v1184, %v1186
    %v1195 = vsel %vm655, %v1186, %v1188
    %v1196 = vsel %vm655, %v1188, %v1190
    %v1197 = vsel %vm655, %v1190, %v1192
    %vm1204 = vcmask 1047708
    %1205 = vst.msk [vmem:[#allocation7] sm:$0xf0] %vm1204, %v1182
    %1206 = vst [vmem:[#allocation7 + $0x8] sm:$0xf0] %v1193
    %1207 = vst [vmem:[#allocation7 + $0x10] sm:$0xf0] %v1194
    %1208 = vst [vmem:[#allocation7 + $0x18] sm:$0xf0] %v1195
    %1209 = vst [vmem:[#allocation7 + $0x20] sm:$0xf0] %v1196
    %1210 = vst.msk [vmem:[#allocation7 + $0x28] sm:$0xf0] %vm670, %v1197
    // Predicated region
    $region30: #{tpu_custom_call.1} parent=1 // pred_check
      _
    $region31: #{tpu_custom_call.1} parent=1 // pred_check_branch
      %1212 = sbr.rel (0) target = $region33
    $region32: #{tpu_custom_call.1} parent=1 // pred_region
      %s1214 = ssub.s32 768, 768
      %1215 = vsyncadd [#allocation6], %s1214
      %s1217 = sshll.u32 [#allocation7], 4
      %s1218 = int_to_ptr.vmem [resolvable:$true] %s1217
      %1220 = dma.vmem_to_hbm [thread:$0]  %s1218, 768, %s6, [#allocation6]
    $region33: #{tpu_custom_call.1} parent=1 // pred_fallthru
      _
    // Predicated region
    $region34: #{tpu_custom_call.1} parent=1 // pred_check
      _
    $region35: #{tpu_custom_call.1} parent=1 // pred_check_branch
      %1222 = sbr.rel (0) target = $region37
    $region36: #{tpu_custom_call.1} parent=1 // pred_region
      %1223 = dma.done [#allocation6], 768
    $region37: #{tpu_custom_call.1} parent=1 // pred_fallthru
      _
    %1224 = vsyncpa [#allocation5], 1
    %1225 = vsyncpa [#allocation6], 1

</llo_original>
